<compile_context>
chip_gen: v7x
topology: tpu7x:2x2x1
jax: 0.10.0
libtpu: 0.0.40
codegen_flags: <defaults>
</compile_context>

<pallas_src>
import functools
import math

import jax
import jax.numpy as jnp
from jax.experimental import pallas as pl
from jax.experimental.pallas import tpu as pltpu


# ----------------------------- Pallas kernels -----------------------------

def _layernorm_kernel(x_ref, g_ref, b_ref, o_ref, *, eps):
    """LayerNorm without residual (used for the embedding LN)."""
    x = x_ref[...].astype(jnp.float32)                     # (tm, D)
    mean = jnp.mean(x, axis=-1, keepdims=True)
    var = jnp.mean((x - mean) ** 2, axis=-1, keepdims=True)
    xn = (x - mean) * jax.lax.rsqrt(var + eps)
    o_ref[...] = (xn * g_ref[...] + b_ref[...]).astype(o_ref.dtype)


def layernorm(x, gamma, beta, eps=1e-12, tm=None):
    """y = LN(x); x: (M, D) bf16, gamma/beta: (1, D) f32."""
    M, D = x.shape
    # NOTE: for real BERT shapes tile M (e.g. 256-512 rows) so the grid can be
    # sharded across TensorCores and VMEM stays bounded; at this toy size one
    # block holds everything.
    tm = M if tm is None else tm
    return pl.pallas_call(
        functools.partial(_layernorm_kernel, eps=eps),
        out_shape=jax.ShapeDtypeStruct((M, D), x.dtype),
        grid=(pl.cdiv(M, tm),),
        in_specs=[
            pl.BlockSpec((tm, D), lambda i: (i, 0)),
            pl.BlockSpec((1, D), lambda i: (0, 0)),
            pl.BlockSpec((1, D), lambda i: (0, 0)),
        ],
        out_specs=pl.BlockSpec((tm, D), lambda i: (i, 0)),
        compiler_params=pltpu.CompilerParams(dimension_semantics=("parallel",)),
    )(x, gamma, beta)


def _attn_block_kernel(h_ref, wqkv_ref, bqkv_ref, wo_ref, bo_ref,
                       g_ref, b_ref, mask_ref, o_ref, *, num_heads, eps):
    """Fused QKV proj -> per-head attention -> out proj -> +residual -> LN."""
    h = h_ref[0]                                           # (S, D) bf16
    S, D = h.shape
    hd = D // num_heads

    # Fused QKV projection; 1/sqrt(hd) is already folded into the Q columns.
    qkv = jnp.dot(h, wqkv_ref[...],
                  preferred_element_type=jnp.float32) + bqkv_ref[...]   # (S, 3D) f32
    mask = mask_ref[0]                                     # (1, S) additive bias (f32)

    ctx = []
    for hh in range(num_heads):                            # static unroll over heads
        q = qkv[:, hh * hd:(hh + 1) * hd]                  # (S, hd)
        k = qkv[:, D + hh * hd:D + (hh + 1) * hd]
        v = qkv[:, 2 * D + hh * hd:2 * D + (hh + 1) * hd]
        s = jnp.dot(q, k.T, preferred_element_type=jnp.float32) + mask  # (S, S)
        s = s - jnp.max(s, axis=-1, keepdims=True)
        p = jnp.exp(s)
        p = p * pl.reciprocal(jnp.sum(p, axis=-1, keepdims=True), approx=True)
        ctx.append(jnp.dot(p, v, preferred_element_type=jnp.float32))
    ctx = jnp.concatenate(ctx, axis=-1)                    # (S, D) lane-dense merge

    attn = jnp.dot(ctx.astype(jnp.bfloat16), wo_ref[...],
                   preferred_element_type=jnp.float32) + bo_ref[...]

    # residual + LayerNorm epilogue (stats in f32)
    x = attn + h.astype(jnp.float32)
    mean = jnp.mean(x, axis=-1, keepdims=True)
    var = jnp.mean((x - mean) ** 2, axis=-1, keepdims=True)
    xn = (x - mean) * jax.lax.rsqrt(var + eps)
    o_ref[0] = (xn * g_ref[...] + b_ref[...]).astype(o_ref.dtype)


def attn_block(h, wqkv, bqkv, wo, bo, gamma, beta, mask_bias, num_heads,
               eps=1e-12):
    """h: (B, S, D) bf16 -> (B, S, D) bf16; one grid step per batch element."""
    B, S, D = h.shape
    return pl.pallas_call(
        functools.partial(_attn_block_kernel, num_heads=num_heads, eps=eps),
        out_shape=jax.ShapeDtypeStruct((B, S, D), h.dtype),
        grid=(B,),
        in_specs=[
            pl.BlockSpec((1, S, D), lambda b: (b, 0, 0)),
            pl.BlockSpec((D, 3 * D), lambda b: (0, 0)),
            pl.BlockSpec((1, 3 * D), lambda b: (0, 0)),
            pl.BlockSpec((D, D), lambda b: (0, 0)),
            pl.BlockSpec((1, D), lambda b: (0, 0)),
            pl.BlockSpec((1, D), lambda b: (0, 0)),
            pl.BlockSpec((1, D), lambda b: (0, 0)),
            pl.BlockSpec((1, 1, S), lambda b: (b, 0, 0)),
        ],
        out_specs=pl.BlockSpec((1, S, D), lambda b: (b, 0, 0)),
        compiler_params=pltpu.CompilerParams(dimension_semantics=("parallel",)),
    )(h, wqkv, bqkv, wo, bo, gamma, beta, mask_bias)


def _ffn_block_kernel(h_ref, w1_ref, b1_ref, w2_ref, b2_ref, g_ref, b_ref,
                      o_ref, *, eps):
    """Fused dense+GELU -> dense+bias -> +residual -> LayerNorm."""
    h = h_ref[...]                                         # (tm, D) bf16
    t = jnp.dot(h, w1_ref[...], preferred_element_type=jnp.float32) + b1_ref[...]
    # tanh-approx GELU (HF BERT default is erf-GELU; difference is negligible
    # and tanh maps onto the EUP slot)
    c = math.sqrt(2.0 / math.pi)
    t = 0.5 * t * (1.0 + jnp.tanh(c * (t + 0.044715 * t * t * t)))
    y = jnp.dot(t.astype(jnp.bfloat16), w2_ref[...],
                preferred_element_type=jnp.float32) + b2_ref[...]
    x = y + h.astype(jnp.float32)
    mean = jnp.mean(x, axis=-1, keepdims=True)
    var = jnp.mean((x - mean) ** 2, axis=-1, keepdims=True)
    xn = (x - mean) * jax.lax.rsqrt(var + eps)
    o_ref[...] = (xn * g_ref[...] + b_ref[...]).astype(o_ref.dtype)


def ffn_block(h, w1, b1, w2, b2, gamma, beta, eps=1e-12, tm=None):
    """h: (M, D) bf16 -> (M, D) bf16, token-major grid over M."""
    M, D = h.shape
    inter = w1.shape[1]
    tm = M if tm is None else tm
    return pl.pallas_call(
        functools.partial(_ffn_block_kernel, eps=eps),
        out_shape=jax.ShapeDtypeStruct((M, D), h.dtype),
        grid=(pl.cdiv(M, tm),),
        in_specs=[
            pl.BlockSpec((tm, D), lambda i: (i, 0)),
            pl.BlockSpec((D, inter), lambda i: (0, 0)),
            pl.BlockSpec((1, inter), lambda i: (0, 0)),
            pl.BlockSpec((inter, D), lambda i: (0, 0)),
            pl.BlockSpec((1, D), lambda i: (0, 0)),
            pl.BlockSpec((1, D), lambda i: (0, 0)),
            pl.BlockSpec((1, D), lambda i: (0, 0)),
        ],
        out_specs=pl.BlockSpec((tm, D), lambda i: (i, 0)),
        compiler_params=pltpu.CompilerParams(dimension_semantics=("parallel",)),
    )(h, w1, b1, w2, b2, gamma, beta)


# ----------------------------- model wrapper -----------------------------

class Config:
    vocab = 50
    type_vocab = 2
    max_len = 8          # small stand-in for the module's max_len=80
    hidden = 32
    heads = 2
    layers = 2
    intermediate = 64
    batch = 2


def init_params(key, cfg):
    D, inter = cfg.hidden, cfg.intermediate
    hd = D // cfg.heads
    scale = 1.0 / math.sqrt(hd)

    def nrm(k, shape):
        return jax.random.normal(k, shape, jnp.float32) * 0.02

    keys = iter(jax.random.split(key, 4 + cfg.layers * 8))
    p = {
        "word_emb": nrm(next(keys), (cfg.vocab, D)).astype(jnp.bfloat16),
        "pos_emb": nrm(next(keys), (cfg.max_len, D)).astype(jnp.bfloat16),
        "type_emb": nrm(next(keys), (cfg.type_vocab, D)).astype(jnp.bfloat16),
        "emb_ln_g": jnp.ones((1, D), jnp.float32),
        "emb_ln_b": jnp.zeros((1, D), jnp.float32),
        "layers": [],
    }
    for _ in range(cfg.layers):
        wq = nrm(next(keys), (D, D))
        wk = nrm(next(keys), (D, D))
        wv = nrm(next(keys), (D, D))
        bq = jnp.zeros((D,), jnp.float32)
        bk = jnp.zeros((D,), jnp.float32)
        bv = jnp.zeros((D,), jnp.float32)
        lyr = {
            # fused QKV weight; 1/sqrt(hd) attention scale folded into the Q
            # projection (weight and bias) so the kernel needs no score scale.
            "wqkv": jnp.concatenate([wq * scale, wk, wv], axis=1).astype(jnp.bfloat16),
            "bqkv": jnp.concatenate([bq * scale, bk, bv]).reshape(1, 3 * D),
            "wo": nrm(next(keys), (D, D)).astype(jnp.bfloat16),
            "bo": jnp.zeros((1, D), jnp.float32),
            "ln1_g": jnp.ones((1, D), jnp.float32),
            "ln1_b": jnp.zeros((1, D), jnp.float32),
            "w1": nrm(next(keys), (D, inter)).astype(jnp.bfloat16),
            "b1": jnp.zeros((1, inter), jnp.float32),
            "w2": nrm(next(keys), (inter, D)).astype(jnp.bfloat16),
            "b2": jnp.zeros((1, D), jnp.float32),
            "ln2_g": jnp.ones((1, D), jnp.float32),
            "ln2_b": jnp.zeros((1, D), jnp.float32),
        }
        p["layers"].append(lyr)
    return p


def bert_cls_embeddings(hidden, pooler, inputs):
    return hidden[:, 0]


def bert_embedder_forward(params, input_ids, token_type_ids, attention_mask, cfg):
    """Returns CLS embeddings, shape (batch, hidden), f32."""
    B, S = input_ids.shape
    D, H = cfg.hidden, cfg.heads
    M = B * S

    # --- embedding lookup (glue: gather) + no-residual LayerNorm (Pallas) ---
    # TODO(synk): tokenizer.encode_plus (string -> ids) has no Pallas
    #             equivalent; token ids are synthesized deterministically.
    word = jnp.take(params["word_emb"], input_ids, axis=0)          # (B, S, D)
    pos = params["pos_emb"][None, :S, :]                            # (1, S, D)
    typ = jnp.take(params["type_emb"], token_type_ids, axis=0)      # (B, S, D)
    emb = (word + pos + typ).reshape(M, D)                          # bf16
    h = layernorm(emb, params["emb_ln_g"], params["emb_ln_b"])      # bf16 (M, D)

    # additive attention-mask bias (0 for valid, -1e9 for pad), shape (B, 1, S)
    mask_bias = ((1.0 - attention_mask.astype(jnp.float32)) * -1e9)[:, None, :]

    # Two fused pallas_calls per layer; only free reshapes between them
    # (token-major <-> batch-major views, no transposes).
    for lyr in params["layers"]:
        h = attn_block(h.reshape(B, S, D), lyr["wqkv"], lyr["bqkv"],
                       lyr["wo"], lyr["bo"], lyr["ln1_g"], lyr["ln1_b"],
                       mask_bias, H)
        h = ffn_block(h.reshape(M, D), lyr["w1"], lyr["b1"],
                      lyr["w2"], lyr["b2"], lyr["ln2_g"], lyr["ln2_b"])

    sequence_output = h.reshape(B, S, D)
    # The embedding strategy only uses the sequence output; the pooler output
    # of BertModel is unused by bert_cls_embeddings, so it is not computed.
    return bert_cls_embeddings(sequence_output, None, None).astype(jnp.float32)


# ----------------------------------- main -----------------------------------

if __name__ == "__main__":
    cfg = Config()
    key = jax.random.PRNGKey(0)
    k_param, k_ids, _ = jax.random.split(key, 3)

    params = init_params(k_param, cfg)

    # synthetic "tokenized" batch (stand-in for tokenizer.encode_plus with
    # add_special_tokens + pad_to_max_length): valid tokens then padding.
    B, S = cfg.batch, cfg.max_len
    input_ids = jax.random.randint(k_ids, (B, S), 1, cfg.vocab, dtype=jnp.int32)
    lengths = jnp.array([S, S - 3], dtype=jnp.int32)           # second sample padded
    positions = jnp.arange(S, dtype=jnp.int32)[None, :]
    attention_mask = (positions < lengths[:, None]).astype(jnp.int32)
    input_ids = jnp.where(attention_mask == 1, input_ids, 0)   # pad token id 0
    token_type_ids = jnp.zeros((B, S), dtype=jnp.int32)

    fwd = jax.jit(functools.partial(bert_embedder_forward, cfg=cfg))
    cls_embeds = fwd(params, input_ids, token_type_ids, attention_mask)
    cls_embeds = jax.block_until_ready(cls_embeds)

    assert cls_embeds.shape == (B, cfg.hidden)
    assert cls_embeds.dtype == jnp.float32
    assert bool(jnp.all(jnp.isfinite(cls_embeds)))
    print("KERNEL_OK")
</pallas_src>

<mosaic_0001>
module attributes {stable_mosaic.version = 11 : i64} {
  func.func @_layernorm_kernel(%arg0: i32, %arg1: memref<16x32xbf16, #tpu.memory_space<vmem>>, %arg2: memref<1x32xf32, #tpu.memory_space<vmem>>, %arg3: memref<1x32xf32, #tpu.memory_space<vmem>>, %arg4: memref<16x32xbf16, #tpu.memory_space<vmem>>) attributes {dimension_semantics = [#tpu.dimension_semantics<parallel>], iteration_bounds = array<i64: 1>, scalar_prefetch = 0 : i64, scratch_operands = 0 : i64, tpu.core_type = #tpu.core_type<tc>, window_params = [{transform_indices = @transform_0, window_bounds = array<i64: 16, 32>}, {pipeline_mode = #tpu.pipeline_mode<synchronous>, transform_indices = @transform_1, window_bounds = array<i64: 1, 32>}, {pipeline_mode = #tpu.pipeline_mode<synchronous>, transform_indices = @transform_2, window_bounds = array<i64: 1, 32>}, {transform_indices = @transform_3, window_bounds = array<i64: 16, 32>}]} {
    %c0 = arith.constant 0 : index
    %c0_0 = arith.constant 0 : index
    %0 = vector.load %arg1[%c0, %c0_0] : memref<16x32xbf16, #tpu.memory_space<vmem>>, vector<16x32xbf16>
    %1 = arith.extf %0 : vector<16x32xbf16> to vector<16x32xf32>
    %cst = arith.constant dense<0.000000e+00> : vector<16xf32>
    %2 = vector.multi_reduction <add>, %1, %cst [1] : vector<16x32xf32> to vector<16xf32>
    %3 = vector.shape_cast %2 : vector<16xf32> to vector<16x1xf32>
    %cst_1 = arith.constant 3.200000e+01 : f32
    %4 = vector.broadcast %cst_1 : f32 to vector<16x1xf32>
    %5 = arith.divf %3, %4 : vector<16x1xf32>
    %6 = vector.broadcast %5 : vector<16x1xf32> to vector<16x32xf32>
    %7 = arith.subf %1, %6 : vector<16x32xf32>
    %8 = arith.mulf %7, %7 : vector<16x32xf32>
    %cst_2 = arith.constant dense<0.000000e+00> : vector<16xf32>
    %9 = vector.multi_reduction <add>, %8, %cst_2 [1] : vector<16x32xf32> to vector<16xf32>
    %10 = vector.shape_cast %9 : vector<16xf32> to vector<16x1xf32>
    %cst_3 = arith.constant 3.200000e+01 : f32
    %11 = vector.broadcast %cst_3 : f32 to vector<16x1xf32>
    %12 = arith.divf %10, %11 : vector<16x1xf32>
    %13 = vector.broadcast %5 : vector<16x1xf32> to vector<16x32xf32>
    %14 = arith.subf %1, %13 : vector<16x32xf32>
    %cst_4 = arith.constant 9.99999996E-13 : f32
    %15 = vector.broadcast %cst_4 : f32 to vector<16x1xf32>
    %16 = arith.addf %12, %15 : vector<16x1xf32>
    %17 = math.rsqrt %16 : vector<16x1xf32>
    %18 = vector.broadcast %17 : vector<16x1xf32> to vector<16x32xf32>
    %19 = arith.mulf %14, %18 : vector<16x32xf32>
    %c0_5 = arith.constant 0 : index
    %c0_6 = arith.constant 0 : index
    %20 = vector.load %arg2[%c0_5, %c0_6] : memref<1x32xf32, #tpu.memory_space<vmem>>, vector<1x32xf32>
    %21 = vector.broadcast %20 : vector<1x32xf32> to vector<16x32xf32>
    %22 = arith.mulf %19, %21 : vector<16x32xf32>
    %c0_7 = arith.constant 0 : index
    %c0_8 = arith.constant 0 : index
    %23 = vector.load %arg3[%c0_7, %c0_8] : memref<1x32xf32, #tpu.memory_space<vmem>>, vector<1x32xf32>
    %24 = vector.broadcast %23 : vector<1x32xf32> to vector<16x32xf32>
    %25 = arith.addf %22, %24 : vector<16x32xf32>
    %26 = arith.truncf %25 : vector<16x32xf32> to vector<16x32xbf16>
    %c0_9 = arith.constant 0 : index
    %c0_10 = arith.constant 0 : index
    %27 = vector.load %arg4[%c0_9, %c0_10] : memref<16x32xbf16, #tpu.memory_space<vmem>>, vector<16x32xbf16>
    tpu.vector_store %arg4[%c0_9, %c0_10], %26 {strides = array<i32>} : memref<16x32xbf16, #tpu.memory_space<vmem>>, vector<16x32xbf16>,
    return
  }
  func.func @transform_0(%arg0: i32) -> (i32, i32) {
    %c0_i32 = arith.constant 0 : i32
    %c0_i32_0 = arith.constant 0 : i32
    return %arg0, %c0_i32 : i32, i32
  }
  func.func @transform_1(%arg0: i32) -> (i32, i32) {
    %c0_i32 = arith.constant 0 : i32
    %c0_i32_0 = arith.constant 0 : i32
    %c0_i32_1 = arith.constant 0 : i32
    return %c0_i32, %c0_i32_0 : i32, i32
  }
  func.func @transform_2(%arg0: i32) -> (i32, i32) {
    %c0_i32 = arith.constant 0 : i32
    %c0_i32_0 = arith.constant 0 : i32
    %c0_i32_1 = arith.constant 0 : i32
    return %c0_i32, %c0_i32_0 : i32, i32
  }
  func.func @transform_3(%arg0: i32) -> (i32, i32) {
    %c0_i32 = arith.constant 0 : i32
    %c0_i32_0 = arith.constant 0 : i32
    return %arg0, %c0_i32 : i32, i32
  }
}

module attributes {stable_mosaic.version = 11 : i64} {
  func.func @_attn_block_kernel(%arg0: i32, %arg1: memref<1x8x32xbf16, #tpu.memory_space<vmem>>, %arg2: memref<32x96xbf16, #tpu.memory_space<vmem>>, %arg3: memref<1x96xf32, #tpu.memory_space<vmem>>, %arg4: memref<32x32xbf16, #tpu.memory_space<vmem>>, %arg5: memref<1x32xf32, #tpu.memory_space<vmem>>, %arg6: memref<1x32xf32, #tpu.memory_space<vmem>>, %arg7: memref<1x32xf32, #tpu.memory_space<vmem>>, %arg8: memref<1x1x8xf32, #tpu.memory_space<vmem>>, %arg9: memref<1x8x32xbf16, #tpu.memory_space<vmem>>) attributes {dimension_semantics = [#tpu.dimension_semantics<parallel>], iteration_bounds = array<i64: 2>, scalar_prefetch = 0 : i64, scratch_operands = 0 : i64, tpu.core_type = #tpu.core_type<tc>, window_params = [{transform_indices = @transform_0, window_bounds = array<i64: 1, 8, 32>}, {pipeline_mode = #tpu.pipeline_mode<synchronous>, transform_indices = @transform_1, window_bounds = array<i64: 32, 96>}, {pipeline_mode = #tpu.pipeline_mode<synchronous>, transform_indices = @transform_2, window_bounds = array<i64: 1, 96>}, {pipeline_mode = #tpu.pipeline_mode<synchronous>, transform_indices = @transform_3, window_bounds = array<i64: 32, 32>}, {pipeline_mode = #tpu.pipeline_mode<synchronous>, transform_indices = @transform_4, window_bounds = array<i64: 1, 32>}, {pipeline_mode = #tpu.pipeline_mode<synchronous>, transform_indices = @transform_5, window_bounds = array<i64: 1, 32>}, {pipeline_mode = #tpu.pipeline_mode<synchronous>, transform_indices = @transform_6, window_bounds = array<i64: 1, 32>}, {transform_indices = @transform_7, window_bounds = array<i64: 1, 1, 8>}, {transform_indices = @transform_8, window_bounds = array<i64: 1, 8, 32>}]} {
    %c0 = arith.constant 0 : index
    %c0_0 = arith.constant 0 : index
    %c0_1 = arith.constant 0 : index
    %0 = vector.load %arg1[%c0, %c0_0, %c0_1] : memref<1x8x32xbf16, #tpu.memory_space<vmem>>, vector<1x8x32xbf16>
    %1 = vector.shape_cast %0 : vector<1x8x32xbf16> to vector<8x32xbf16>
    %c0_2 = arith.constant 0 : index
    %c0_3 = arith.constant 0 : index
    %2 = vector.load %arg2[%c0_2, %c0_3] : memref<32x96xbf16, #tpu.memory_space<vmem>>, vector<32x96xbf16>
    %cst = arith.constant dense<0.000000e+00> : vector<8x96xf32>
    %3 = tpu.matmul %1, %2, %cst {dimension_numbers = #tpu.dot_dimension_numbers<[1], [0], [0], [1], [0, 0, 1, 1], [], []>} : vector<8x32xbf16>, vector<32x96xbf16>, vector<8x96xf32> -> vector<8x96xf32>
    %c0_4 = arith.constant 0 : index
    %c0_5 = arith.constant 0 : index
    %4 = vector.load %arg3[%c0_4, %c0_5] : memref<1x96xf32, #tpu.memory_space<vmem>>, vector<1x96xf32>
    %5 = vector.broadcast %4 : vector<1x96xf32> to vector<8x96xf32>
    %6 = arith.addf %3, %5 : vector<8x96xf32>
    %c0_6 = arith.constant 0 : index
    %c0_7 = arith.constant 0 : index
    %c0_8 = arith.constant 0 : index
    %7 = vector.load %arg8[%c0_6, %c0_7, %c0_8] : memref<1x1x8xf32, #tpu.memory_space<vmem>>, vector<1x1x8xf32>
    %8 = vector.shape_cast %7 : vector<1x1x8xf32> to vector<1x8xf32>
    %9 = vector.extract_strided_slice %6 {offsets = [0, 0], sizes = [8, 16], strides = [1, 1]} : vector<8x96xf32> to vector<8x16xf32>
    %10 = vector.extract_strided_slice %6 {offsets = [0, 32], sizes = [8, 16], strides = [1, 1]} : vector<8x96xf32> to vector<8x16xf32>
    %11 = vector.extract_strided_slice %6 {offsets = [0, 64], sizes = [8, 16], strides = [1, 1]} : vector<8x96xf32> to vector<8x16xf32>
    %12 = tpu.transpose %10, [1, 0] : vector<8x16xf32> -> vector<16x8xf32>
    %cst_9 = arith.constant dense<0.000000e+00> : vector<8x8xf32>
    %13 = tpu.matmul %9, %12, %cst_9 {dimension_numbers = #tpu.dot_dimension_numbers<[1], [0], [0], [1], [0, 0, 1, 1], [], []>} : vector<8x16xf32>, vector<16x8xf32>, vector<8x8xf32> -> vector<8x8xf32>
    %14 = vector.broadcast %8 : vector<1x8xf32> to vector<8x8xf32>
    %15 = arith.addf %13, %14 : vector<8x8xf32>
    %cst_10 = arith.constant dense<0xFF800000> : vector<8xf32>
    %16 = vector.multi_reduction <maximumf>, %15, %cst_10 [1] : vector<8x8xf32> to vector<8xf32>
    %17 = vector.shape_cast %16 : vector<8xf32> to vector<8x1xf32>
    %18 = vector.broadcast %17 : vector<8x1xf32> to vector<8x8xf32>
    %19 = arith.subf %15, %18 : vector<8x8xf32>
    %20 = math.exp %19 : vector<8x8xf32>
    %cst_11 = arith.constant dense<0.000000e+00> : vector<8xf32>
    %21 = vector.multi_reduction <add>, %20, %cst_11 [1] : vector<8x8xf32> to vector<8xf32>
    %22 = vector.shape_cast %21 : vector<8xf32> to vector<8x1xf32>
    %23 = tpu.reciprocal %22 {approx = true} : vector<8x1xf32> -> vector<8x1xf32>
    %24 = vector.broadcast %23 : vector<8x1xf32> to vector<8x8xf32>
    %25 = arith.mulf %20, %24 : vector<8x8xf32>
    %cst_12 = arith.constant dense<0.000000e+00> : vector<8x16xf32>
    %26 = tpu.matmul %25, %11, %cst_12 {dimension_numbers = #tpu.dot_dimension_numbers<[1], [0], [0], [1], [0, 0, 1, 1], [], []>} : vector<8x8xf32>, vector<8x16xf32>, vector<8x16xf32> -> vector<8x16xf32>
    %27 = vector.extract_strided_slice %6 {offsets = [0, 16], sizes = [8, 16], strides = [1, 1]} : vector<8x96xf32> to vector<8x16xf32>
    %28 = vector.extract_strided_slice %6 {offsets = [0, 48], sizes = [8, 16], strides = [1, 1]} : vector<8x96xf32> to vector<8x16xf32>
    %29 = vector.extract_strided_slice %6 {offsets = [0, 80], sizes = [8, 16], strides = [1, 1]} : vector<8x96xf32> to vector<8x16xf32>
    %30 = tpu.transpose %28, [1, 0] : vector<8x16xf32> -> vector<16x8xf32>
    %cst_13 = arith.constant dense<0.000000e+00> : vector<8x8xf32>
    %31 = tpu.matmul %27, %30, %cst_13 {dimension_numbers = #tpu.dot_dimension_numbers<[1], [0], [0], [1], [0, 0, 1, 1], [], []>} : vector<8x16xf32>, vector<16x8xf32>, vector<8x8xf32> -> vector<8x8xf32>
    %32 = vector.broadcast %8 : vector<1x8xf32> to vector<8x8xf32>
    %33 = arith.addf %31, %32 : vector<8x8xf32>
    %cst_14 = arith.constant dense<0xFF800000> : vector<8xf32>
    %34 = vector.multi_reduction <maximumf>, %33, %cst_14 [1] : vector<8x8xf32> to vector<8xf32>
    %35 = vector.shape_cast %34 : vector<8xf32> to vector<8x1xf32>
    %36 = vector.broadcast %35 : vector<8x1xf32> to vector<8x8xf32>
    %37 = arith.subf %33, %36 : vector<8x8xf32>
    %38 = math.exp %37 : vector<8x8xf32>
    %cst_15 = arith.constant dense<0.000000e+00> : vector<8xf32>
    %39 = vector.multi_reduction <add>, %38, %cst_15 [1] : vector<8x8xf32> to vector<8xf32>
    %40 = vector.shape_cast %39 : vector<8xf32> to vector<8x1xf32>
    %41 = tpu.reciprocal %40 {approx = true} : vector<8x1xf32> -> vector<8x1xf32>
    %42 = vector.broadcast %41 : vector<8x1xf32> to vector<8x8xf32>
    %43 = arith.mulf %38, %42 : vector<8x8xf32>
    %cst_16 = arith.constant dense<0.000000e+00> : vector<8x16xf32>
    %44 = tpu.matmul %43, %29, %cst_16 {dimension_numbers = #tpu.dot_dimension_numbers<[1], [0], [0], [1], [0, 0, 1, 1], [], []>} : vector<8x8xf32>, vector<8x16xf32>, vector<8x16xf32> -> vector<8x16xf32>
    %45 = tpu.concatenate %26, %44 in 1 : vector<8x16xf32>, vector<8x16xf32> -> vector<8x32xf32>
    %46 = arith.truncf %45 : vector<8x32xf32> to vector<8x32xbf16>
    %c0_17 = arith.constant 0 : index
    %c0_18 = arith.constant 0 : index
    %47 = vector.load %arg4[%c0_17, %c0_18] : memref<32x32xbf16, #tpu.memory_space<vmem>>, vector<32x32xbf16>
    %cst_19 = arith.constant dense<0.000000e+00> : vector<8x32xf32>
    %48 = tpu.matmul %46, %47, %cst_19 {dimension_numbers = #tpu.dot_dimension_numbers<[1], [0], [0], [1], [0, 0, 1, 1], [], []>} : vector<8x32xbf16>, vector<32x32xbf16>, vector<8x32xf32> -> vector<8x32xf32>
    %c0_20 = arith.constant 0 : index
    %c0_21 = arith.constant 0 : index
    %49 = vector.load %arg5[%c0_20, %c0_21] : memref<1x32xf32, #tpu.memory_space<vmem>>, vector<1x32xf32>
    %50 = vector.broadcast %49 : vector<1x32xf32> to vector<8x32xf32>
    %51 = arith.addf %48, %50 : vector<8x32xf32>
    %52 = arith.extf %1 : vector<8x32xbf16> to vector<8x32xf32>
    %53 = arith.addf %51, %52 : vector<8x32xf32>
    %cst_22 = arith.constant dense<0.000000e+00> : vector<8xf32>
    %54 = vector.multi_reduction <add>, %53, %cst_22 [1] : vector<8x32xf32> to vector<8xf32>
    %55 = vector.shape_cast %54 : vector<8xf32> to vector<8x1xf32>
    %cst_23 = arith.constant 3.200000e+01 : f32
    %56 = vector.broadcast %cst_23 : f32 to vector<8x1xf32>
    %57 = arith.divf %55, %56 : vector<8x1xf32>
    %58 = vector.broadcast %57 : vector<8x1xf32> to vector<8x32xf32>
    %59 = arith.subf %53, %58 : vector<8x32xf32>
    %60 = arith.mulf %59, %59 : vector<8x32xf32>
    %cst_24 = arith.constant dense<0.000000e+00> : vector<8xf32>
    %61 = vector.multi_reduction <add>, %60, %cst_24 [1] : vector<8x32xf32> to vector<8xf32>
    %62 = vector.shape_cast %61 : vector<8xf32> to vector<8x1xf32>
    %cst_25 = arith.constant 3.200000e+01 : f32
    %63 = vector.broadcast %cst_25 : f32 to vector<8x1xf32>
    %64 = arith.divf %62, %63 : vector<8x1xf32>
    %65 = vector.broadcast %57 : vector<8x1xf32> to vector<8x32xf32>
    %66 = arith.subf %53, %65 : vector<8x32xf32>
    %cst_26 = arith.constant 9.99999996E-13 : f32
    %67 = vector.broadcast %cst_26 : f32 to vector<8x1xf32>
    %68 = arith.addf %64, %67 : vector<8x1xf32>
    %69 = math.rsqrt %68 : vector<8x1xf32>
    %70 = vector.broadcast %69 : vector<8x1xf32> to vector<8x32xf32>
    %71 = arith.mulf %66, %70 : vector<8x32xf32>
    %c0_27 = arith.constant 0 : index
    %c0_28 = arith.constant 0 : index
    %72 = vector.load %arg6[%c0_27, %c0_28] : memref<1x32xf32, #tpu.memory_space<vmem>>, vector<1x32xf32>
    %73 = vector.broadcast %72 : vector<1x32xf32> to vector<8x32xf32>
    %74 = arith.mulf %71, %73 : vector<8x32xf32>
    %c0_29 = arith.constant 0 : index
    %c0_30 = arith.constant 0 : index
    %75 = vector.load %arg7[%c0_29, %c0_30] : memref<1x32xf32, #tpu.memory_space<vmem>>, vector<1x32xf32>
    %76 = vector.broadcast %75 : vector<1x32xf32> to vector<8x32xf32>
    %77 = arith.addf %74, %76 : vector<8x32xf32>
    %78 = arith.truncf %77 : vector<8x32xf32> to vector<8x32xbf16>
    %c0_31 = arith.constant 0 : index
    %c0_32 = arith.constant 0 : index
    %c0_33 = arith.constant 0 : index
    %79 = vector.load %arg9[%c0_31, %c0_32, %c0_33] : memref<1x8x32xbf16, #tpu.memory_space<vmem>>, vector<1x8x32xbf16>
    %80 = vector.shape_cast %79 : vector<1x8x32xbf16> to vector<8x32xbf16>
    %81 = vector.shape_cast %78 : vector<8x32xbf16> to vector<1x8x32xbf16>
    tpu.vector_store %arg9[%c0_31, %c0_32, %c0_33], %81 {strides = array<i32>} : memref<1x8x32xbf16, #tpu.memory_space<vmem>>, vector<1x8x32xbf16>,
    return
  }
  func.func @transform_0(%arg0: i32) -> (i32, i32, i32) {
    %c0_i32 = arith.constant 0 : i32
    %c0_i32_0 = arith.constant 0 : i32
    %c0_i32_1 = arith.constant 0 : i32
    return %arg0, %c0_i32, %c0_i32_0 : i32, i32, i32
  }
  func.func @transform_1(%arg0: i32) -> (i32, i32) {
    %c0_i32 = arith.constant 0 : i32
    %c0_i32_0 = arith.constant 0 : i32
    %c0_i32_1 = arith.constant 0 : i32
    return %c0_i32, %c0_i32_0 : i32, i32
  }
  func.func @transform_2(%arg0: i32) -> (i32, i32) {
    %c0_i32 = arith.constant 0 : i32
    %c0_i32_0 = arith.constant 0 : i32
    %c0_i32_1 = arith.constant 0 : i32
    return %c0_i32, %c0_i32_0 : i32, i32
  }
  func.func @transform_3(%arg0: i32) -> (i32, i32) {
    %c0_i32 = arith.constant 0 : i32
    %c0_i32_0 = arith.constant 0 : i32
    %c0_i32_1 = arith.constant 0 : i32
    return %c0_i32, %c0_i32_0 : i32, i32
  }
  func.func @transform_4(%arg0: i32) -> (i32, i32) {
    %c0_i32 = arith.constant 0 : i32
    %c0_i32_0 = arith.constant 0 : i32
    %c0_i32_1 = arith.constant 0 : i32
    return %c0_i32, %c0_i32_0 : i32, i32
  }
  func.func @transform_5(%arg0: i32) -> (i32, i32) {
    %c0_i32 = arith.constant 0 : i32
    %c0_i32_0 = arith.constant 0 : i32
    %c0_i32_1 = arith.constant 0 : i32
    return %c0_i32, %c0_i32_0 : i32, i32
  }
  func.func @transform_6(%arg0: i32) -> (i32, i32) {
    %c0_i32 = arith.constant 0 : i32
    %c0_i32_0 = arith.constant 0 : i32
    %c0_i32_1 = arith.constant 0 : i32
    return %c0_i32, %c0_i32_0 : i32, i32
  }
  func.func @transform_7(%arg0: i32) -> (i32, i32, i32) {
    %c0_i32 = arith.constant 0 : i32
    %c0_i32_0 = arith.constant 0 : i32
    %c0_i32_1 = arith.constant 0 : i32
    return %arg0, %c0_i32, %c0_i32_0 : i32, i32, i32
  }
  func.func @transform_8(%arg0: i32) -> (i32, i32, i32) {
    %c0_i32 = arith.constant 0 : i32
    %c0_i32_0 = arith.constant 0 : i32
    %c0_i32_1 = arith.constant 0 : i32
    return %arg0, %c0_i32, %c0_i32_0 : i32, i32, i32
  }
}

module attributes {stable_mosaic.version = 11 : i64} {
  func.func @_ffn_block_kernel(%arg0: i32, %arg1: memref<16x32xbf16, #tpu.memory_space<vmem>>, %arg2: memref<32x64xbf16, #tpu.memory_space<vmem>>, %arg3: memref<1x64xf32, #tpu.memory_space<vmem>>, %arg4: memref<64x32xbf16, #tpu.memory_space<vmem>>, %arg5: memref<1x32xf32, #tpu.memory_space<vmem>>, %arg6: memref<1x32xf32, #tpu.memory_space<vmem>>, %arg7: memref<1x32xf32, #tpu.memory_space<vmem>>, %arg8: memref<16x32xbf16, #tpu.memory_space<vmem>>) attributes {dimension_semantics = [#tpu.dimension_semantics<parallel>], iteration_bounds = array<i64: 1>, scalar_prefetch = 0 : i64, scratch_operands = 0 : i64, tpu.core_type = #tpu.core_type<tc>, window_params = [{transform_indices = @transform_0, window_bounds = array<i64: 16, 32>}, {pipeline_mode = #tpu.pipeline_mode<synchronous>, transform_indices = @transform_1, window_bounds = array<i64: 32, 64>}, {pipeline_mode = #tpu.pipeline_mode<synchronous>, transform_indices = @transform_2, window_bounds = array<i64: 1, 64>}, {pipeline_mode = #tpu.pipeline_mode<synchronous>, transform_indices = @transform_3, window_bounds = array<i64: 64, 32>}, {pipeline_mode = #tpu.pipeline_mode<synchronous>, transform_indices = @transform_4, window_bounds = array<i64: 1, 32>}, {pipeline_mode = #tpu.pipeline_mode<synchronous>, transform_indices = @transform_5, window_bounds = array<i64: 1, 32>}, {pipeline_mode = #tpu.pipeline_mode<synchronous>, transform_indices = @transform_6, window_bounds = array<i64: 1, 32>}, {transform_indices = @transform_7, window_bounds = array<i64: 16, 32>}]} {
    %c0 = arith.constant 0 : index
    %c0_0 = arith.constant 0 : index
    %0 = vector.load %arg1[%c0, %c0_0] : memref<16x32xbf16, #tpu.memory_space<vmem>>, vector<16x32xbf16>
    %c0_1 = arith.constant 0 : index
    %c0_2 = arith.constant 0 : index
    %1 = vector.load %arg2[%c0_1, %c0_2] : memref<32x64xbf16, #tpu.memory_space<vmem>>, vector<32x64xbf16>
    %cst = arith.constant dense<0.000000e+00> : vector<16x64xf32>
    %2 = tpu.matmul %0, %1, %cst {dimension_numbers = #tpu.dot_dimension_numbers<[1], [0], [0], [1], [0, 0, 1, 1], [], []>} : vector<16x32xbf16>, vector<32x64xbf16>, vector<16x64xf32> -> vector<16x64xf32>
    %c0_3 = arith.constant 0 : index
    %c0_4 = arith.constant 0 : index
    %3 = vector.load %arg3[%c0_3, %c0_4] : memref<1x64xf32, #tpu.memory_space<vmem>>, vector<1x64xf32>
    %4 = vector.broadcast %3 : vector<1x64xf32> to vector<16x64xf32>
    %5 = arith.addf %2, %4 : vector<16x64xf32>
    %cst_5 = arith.constant 5.000000e-01 : f32
    %6 = vector.broadcast %cst_5 : f32 to vector<16x64xf32>
    %7 = arith.mulf %6, %5 : vector<16x64xf32>
    %cst_6 = arith.constant 4.471500e-02 : f32
    %8 = vector.broadcast %cst_6 : f32 to vector<16x64xf32>
    %9 = arith.mulf %8, %5 : vector<16x64xf32>
    %10 = arith.mulf %9, %5 : vector<16x64xf32>
    %11 = arith.mulf %10, %5 : vector<16x64xf32>
    %12 = arith.addf %5, %11 : vector<16x64xf32>
    %cst_7 = arith.constant 0.797884583 : f32
    %13 = vector.broadcast %cst_7 : f32 to vector<16x64xf32>
    %14 = arith.mulf %13, %12 : vector<16x64xf32>
    %15 = math.tanh %14 : vector<16x64xf32>
    %cst_8 = arith.constant 1.000000e+00 : f32
    %16 = vector.broadcast %cst_8 : f32 to vector<16x64xf32>
    %17 = arith.addf %16, %15 : vector<16x64xf32>
    %18 = arith.mulf %7, %17 : vector<16x64xf32>
    %19 = arith.truncf %18 : vector<16x64xf32> to vector<16x64xbf16>
    %c0_9 = arith.constant 0 : index
    %c0_10 = arith.constant 0 : index
    %20 = vector.load %arg4[%c0_9, %c0_10] : memref<64x32xbf16, #tpu.memory_space<vmem>>, vector<64x32xbf16>
    %cst_11 = arith.constant dense<0.000000e+00> : vector<16x32xf32>
    %21 = tpu.matmul %19, %20, %cst_11 {dimension_numbers = #tpu.dot_dimension_numbers<[1], [0], [0], [1], [0, 0, 1, 1], [], []>} : vector<16x64xbf16>, vector<64x32xbf16>, vector<16x32xf32> -> vector<16x32xf32>
    %c0_12 = arith.constant 0 : index
    %c0_13 = arith.constant 0 : index
    %22 = vector.load %arg5[%c0_12, %c0_13] : memref<1x32xf32, #tpu.memory_space<vmem>>, vector<1x32xf32>
    %23 = vector.broadcast %22 : vector<1x32xf32> to vector<16x32xf32>
    %24 = arith.addf %21, %23 : vector<16x32xf32>
    %25 = arith.extf %0 : vector<16x32xbf16> to vector<16x32xf32>
    %26 = arith.addf %24, %25 : vector<16x32xf32>
    %cst_14 = arith.constant dense<0.000000e+00> : vector<16xf32>
    %27 = vector.multi_reduction <add>, %26, %cst_14 [1] : vector<16x32xf32> to vector<16xf32>
    %28 = vector.shape_cast %27 : vector<16xf32> to vector<16x1xf32>
    %cst_15 = arith.constant 3.200000e+01 : f32
    %29 = vector.broadcast %cst_15 : f32 to vector<16x1xf32>
    %30 = arith.divf %28, %29 : vector<16x1xf32>
    %31 = vector.broadcast %30 : vector<16x1xf32> to vector<16x32xf32>
    %32 = arith.subf %26, %31 : vector<16x32xf32>
    %33 = arith.mulf %32, %32 : vector<16x32xf32>
    %cst_16 = arith.constant dense<0.000000e+00> : vector<16xf32>
    %34 = vector.multi_reduction <add>, %33, %cst_16 [1] : vector<16x32xf32> to vector<16xf32>
    %35 = vector.shape_cast %34 : vector<16xf32> to vector<16x1xf32>
    %cst_17 = arith.constant 3.200000e+01 : f32
    %36 = vector.broadcast %cst_17 : f32 to vector<16x1xf32>
    %37 = arith.divf %35, %36 : vector<16x1xf32>
    %38 = vector.broadcast %30 : vector<16x1xf32> to vector<16x32xf32>
    %39 = arith.subf %26, %38 : vector<16x32xf32>
    %cst_18 = arith.constant 9.99999996E-13 : f32
    %40 = vector.broadcast %cst_18 : f32 to vector<16x1xf32>
    %41 = arith.addf %37, %40 : vector<16x1xf32>
    %42 = math.rsqrt %41 : vector<16x1xf32>
    %43 = vector.broadcast %42 : vector<16x1xf32> to vector<16x32xf32>
    %44 = arith.mulf %39, %43 : vector<16x32xf32>
    %c0_19 = arith.constant 0 : index
    %c0_20 = arith.constant 0 : index
    %45 = vector.load %arg6[%c0_19, %c0_20] : memref<1x32xf32, #tpu.memory_space<vmem>>, vector<1x32xf32>
    %46 = vector.broadcast %45 : vector<1x32xf32> to vector<16x32xf32>
    %47 = arith.mulf %44, %46 : vector<16x32xf32>
    %c0_21 = arith.constant 0 : index
    %c0_22 = arith.constant 0 : index
    %48 = vector.load %arg7[%c0_21, %c0_22] : memref<1x32xf32, #tpu.memory_space<vmem>>, vector<1x32xf32>
    %49 = vector.broadcast %48 : vector<1x32xf32> to vector<16x32xf32>
    %50 = arith.addf %47, %49 : vector<16x32xf32>
    %51 = arith.truncf %50 : vector<16x32xf32> to vector<16x32xbf16>
    %c0_23 = arith.constant 0 : index
    %c0_24 = arith.constant 0 : index
    %52 = vector.load %arg8[%c0_23, %c0_24] : memref<16x32xbf16, #tpu.memory_space<vmem>>, vector<16x32xbf16>
    tpu.vector_store %arg8[%c0_23, %c0_24], %51 {strides = array<i32>} : memref<16x32xbf16, #tpu.memory_space<vmem>>, vector<16x32xbf16>,
    return
  }
  func.func @transform_0(%arg0: i32) -> (i32, i32) {
    %c0_i32 = arith.constant 0 : i32
    %c0_i32_0 = arith.constant 0 : i32
    return %arg0, %c0_i32 : i32, i32
  }
  func.func @transform_1(%arg0: i32) -> (i32, i32) {
    %c0_i32 = arith.constant 0 : i32
    %c0_i32_0 = arith.constant 0 : i32
    %c0_i32_1 = arith.constant 0 : i32
    return %c0_i32, %c0_i32_0 : i32, i32
  }
  func.func @transform_2(%arg0: i32) -> (i32, i32) {
    %c0_i32 = arith.constant 0 : i32
    %c0_i32_0 = arith.constant 0 : i32
    %c0_i32_1 = arith.constant 0 : i32
    return %c0_i32, %c0_i32_0 : i32, i32
  }
  func.func @transform_3(%arg0: i32) -> (i32, i32) {
    %c0_i32 = arith.constant 0 : i32
    %c0_i32_0 = arith.constant 0 : i32
    %c0_i32_1 = arith.constant 0 : i32
    return %c0_i32, %c0_i32_0 : i32, i32
  }
  func.func @transform_4(%arg0: i32) -> (i32, i32) {
    %c0_i32 = arith.constant 0 : i32
    %c0_i32_0 = arith.constant 0 : i32
    %c0_i32_1 = arith.constant 0 : i32
    return %c0_i32, %c0_i32_0 : i32, i32
  }
  func.func @transform_5(%arg0: i32) -> (i32, i32) {
    %c0_i32 = arith.constant 0 : i32
    %c0_i32_0 = arith.constant 0 : i32
    %c0_i32_1 = arith.constant 0 : i32
    return %c0_i32, %c0_i32_0 : i32, i32
  }
  func.func @transform_6(%arg0: i32) -> (i32, i32) {
    %c0_i32 = arith.constant 0 : i32
    %c0_i32_0 = arith.constant 0 : i32
    %c0_i32_1 = arith.constant 0 : i32
    return %c0_i32, %c0_i32_0 : i32, i32
  }
  func.func @transform_7(%arg0: i32) -> (i32, i32) {
    %c0_i32 = arith.constant 0 : i32
    %c0_i32_0 = arith.constant 0 : i32
    return %arg0, %c0_i32 : i32, i32
  }
}

</mosaic_0001>

<llo_original>
// kernel: bert_embedder_forward.5
$region0: #{bert_embedder_forward.5}
  #allocation0 [shape = 'u32[]', space=smem, size = 0x4, offset = 0x4, fixed_abs, tag = 'smem constant byte address 0x4 - core index']
  #allocation1 [shape = 'u32[144,128]{1,0:T(1,128)}', space=vmem, size = 0x12000, scoped, tag = 'internal scratch']
  %s0 = inlined_call_operand.vmem [shape: bf16[16,32], index: 0, kind: input, shape index: {}]
  %s1 = inlined_call_operand.vmem [shape: f32[1,32], index: 1, kind: input, shape index: {}]
  %s2 = inlined_call_operand.vmem [shape: f32[1,32], index: 2, kind: input, shape index: {}]
  %s3 = inlined_call_operand.vmem [shape: bf16[16,32], index: 3, kind: output, shape index: {}]
  %s4 = sld [smem:[#allocation0]]
  $region22: #{bert_embedder_forward.5} parent=0
    _
  %s6 = ssub.s32 1, %s4
  %s7 = scalar_select 0, %s6, %s4
  // Predicated region
  $region2: #{bert_embedder_forward.5} parent=0 // pred_check
    _
  $region3: #{bert_embedder_forward.5} parent=0 // pred_check_branch
    %9 = sbr.rel (0) target = $region5
  $region4: #{bert_embedder_forward.5} parent=0 // pred_region
    _
  $region5: #{bert_embedder_forward.5} parent=0 // pred_fallthru
    _
  // Predicated region
  $region6: #{bert_embedder_forward.5} parent=0 // pred_check
    _
  $region7: #{bert_embedder_forward.5} parent=0 // pred_check_branch
    %11 = sbr.rel (0) target = $region9
  $region8: #{bert_embedder_forward.5} parent=0 // pred_region
    _
  $region9: #{bert_embedder_forward.5} parent=0 // pred_fallthru
    _
  // Predicated region
  $region10: #{bert_embedder_forward.5} parent=0 // pred_check
    _
  $region11: #{bert_embedder_forward.5} parent=0 // pred_check_branch
    %13 = sbr.rel (0) target = $region13
  $region12: #{bert_embedder_forward.5} parent=0 // pred_region
    _
  $region13: #{bert_embedder_forward.5} parent=0 // pred_fallthru
    _
  %v14 = vld [vmem:[%s0] sm:$0xf]
  %v15 = vld [vmem:[%s0 + $0x4] sm:$0xf]
  %v16 = vunpack.c.l.bf16 %v14
  %v17 = vunpack.c.l.bf16 %v15
  %vm18 = vcmask 261120
  %v19 = vsel %vm18, %v16, 0.0
  %20 = vadd.xlane.f32.xlu0 %v19
  %v21 = vpop.xlane.xlu0 %20
  %v22 = vsel %vm18, %v17, 0.0
  %23 = vadd.xlane.f32.xlu0 %v22
  %v24 = vpop.xlane.xlu0 %23
  %v25 = vrcp.pop 32.0
  %v26 = vmul.f32 %v21, %v25
  %v27 = vmul.f32 %v24, %v25
  %v28 = vsub.f32 %v16, %v26
  %v29 = vsub.f32 %v17, %v27
  %v30 = vmul.f32 %v28, %v28
  %v31 = vmul.f32 %v29, %v29
  %v32 = vsel %vm18, %v30, 0.0
  %33 = vadd.xlane.f32.xlu0 %v32
  %v34 = vpop.xlane.xlu0 %33
  %v35 = vsel %vm18, %v31, 0.0
  %36 = vadd.xlane.f32.xlu0 %v35
  %v37 = vpop.xlane.xlu0 %36
  %v38 = vmul.f32 %v34, %v25
  %v39 = vmul.f32 %v37, %v25
  %v40 = vadd.f32 %v38, 1e-12
  %v41 = vadd.f32 %v39, 1e-12
  %v42 = vrsqrt.pop %v40
  %v43 = vrsqrt.pop %v41
  %v44 = vmul.f32 %v28, %v42
  %v45 = vmul.f32 %v29, %v43
  %v46 = vld [vmem:[%s1] sm:$0x1]
  %v48 = vlaneseq
  %v49 = vshrl.u32 %v48, 7
  %v50 = vsub.s32 0, %v49
  %v51 = vrot.slane %v46, %v50
  %v53 = vmul.f32 %v44, %v51
  %v54 = vmul.f32 %v45, %v51
  %v55 = vld [vmem:[%s2] sm:$0x1]
  %v57 = vlaneseq
  %v58 = vshrl.u32 %v57, 7
  %v59 = vsub.s32 0, %v58
  %v60 = vrot.slane %v55, %v59
  %v62 = vadd.f32 %v53, %v60
  %v63 = vadd.f32 %v54, %v60
  %v64 = vpack.c.bf16 %v63, %v62
  %v66 = vunpack.c.l.b16 %v64
  %v67 = vunpack.c.h.b16 %v64
  %v68 = vpack.c.b16 %v66, %v66
  %v69 = vpack.c.b16 %v67, %v67
  %vm72 = vcmask 257024
  %73 = vst.msk [vmem:[%s3] sm:$0xf] %vm72, %v68
  %74 = vst.msk [vmem:[%s3 + $0x4] sm:$0xf] %vm72, %v69
  // Predicated region
  $region14: #{bert_embedder_forward.5} parent=0 // pred_check
    _
  $region15: #{bert_embedder_forward.5} parent=0 // pred_check_branch
    %76 = sbr.rel (0) target = $region17
  $region16: #{bert_embedder_forward.5} parent=0 // pred_region
    _
  $region17: #{bert_embedder_forward.5} parent=0 // pred_fallthru
    _
  // Predicated region
  $region18: #{bert_embedder_forward.5} parent=0 // pred_check
    _
  $region19: #{bert_embedder_forward.5} parent=0 // pred_check_branch
    %78 = sbr.rel (0) target = $region21
  $region20: #{bert_embedder_forward.5} parent=0 // pred_region
    _
  $region21: #{bert_embedder_forward.5} parent=0 // pred_fallthru
    _

// kernel: bert_embedder_forward.7
$region0: #{bert_embedder_forward.7}
  #allocation0 [shape = 'u32[]', space=smem, size = 0x4, offset = 0x4, fixed_abs, tag = 'smem constant byte address 0x4 - core index']
  #allocation1 [shape = 'u32[144,128]{1,0:T(1,128)}', space=vmem, size = 0x12000, scoped, tag = 'internal scratch']
  %s0 = inlined_call_operand.vmem [shape: bf16[16,32], index: 0, kind: input, shape index: {}]
  %s1 = inlined_call_operand.vmem [shape: bf16[32,64], index: 1, kind: input, shape index: {}]
  %s2 = inlined_call_operand.vmem [shape: f32[1,64], index: 2, kind: input, shape index: {}]
  %s3 = inlined_call_operand.vmem [shape: bf16[64,32], index: 3, kind: input, shape index: {}]
  %s4 = inlined_call_operand.vmem [shape: f32[1,32], index: 4, kind: input, shape index: {}]
  %s5 = inlined_call_operand.vmem [shape: f32[1,32], index: 5, kind: input, shape index: {}]
  %s6 = inlined_call_operand.vmem [shape: f32[1,32], index: 6, kind: input, shape index: {}]
  %s7 = inlined_call_operand.vmem [shape: bf16[16,32], index: 7, kind: output, shape index: {}]
  %s8 = sld [smem:[#allocation0]]
  $region38: #{bert_embedder_forward.7} parent=0
    _
  %s10 = ssub.s32 1, %s8
  %s11 = scalar_select 0, %s10, %s8
  // Predicated region
  $region2: #{bert_embedder_forward.7} parent=0 // pred_check
    _
  $region3: #{bert_embedder_forward.7} parent=0 // pred_check_branch
    %13 = sbr.rel (0) target = $region5
  $region4: #{bert_embedder_forward.7} parent=0 // pred_region
    _
  $region5: #{bert_embedder_forward.7} parent=0 // pred_fallthru
    _
  // Predicated region
  $region6: #{bert_embedder_forward.7} parent=0 // pred_check
    _
  $region7: #{bert_embedder_forward.7} parent=0 // pred_check_branch
    %15 = sbr.rel (0) target = $region9
  $region8: #{bert_embedder_forward.7} parent=0 // pred_region
    _
  $region9: #{bert_embedder_forward.7} parent=0 // pred_fallthru
    _
  // Predicated region
  $region10: #{bert_embedder_forward.7} parent=0 // pred_check
    _
  $region11: #{bert_embedder_forward.7} parent=0 // pred_check_branch
    %17 = sbr.rel (0) target = $region13
  $region12: #{bert_embedder_forward.7} parent=0 // pred_region
    _
  $region13: #{bert_embedder_forward.7} parent=0 // pred_fallthru
    _
  // Predicated region
  $region14: #{bert_embedder_forward.7} parent=0 // pred_check
    _
  $region15: #{bert_embedder_forward.7} parent=0 // pred_check_branch
    %19 = sbr.rel (0) target = $region17
  $region16: #{bert_embedder_forward.7} parent=0 // pred_region
    _
  $region17: #{bert_embedder_forward.7} parent=0 // pred_fallthru
    _
  // Predicated region
  $region18: #{bert_embedder_forward.7} parent=0 // pred_check
    _
  $region19: #{bert_embedder_forward.7} parent=0 // pred_check_branch
    %21 = sbr.rel (0) target = $region21
  $region20: #{bert_embedder_forward.7} parent=0 // pred_region
    _
  $region21: #{bert_embedder_forward.7} parent=0 // pred_fallthru
    _
  // Predicated region
  $region22: #{bert_embedder_forward.7} parent=0 // pred_check
    _
  $region23: #{bert_embedder_forward.7} parent=0 // pred_check_branch
    %23 = sbr.rel (0) target = $region25
  $region24: #{bert_embedder_forward.7} parent=0 // pred_region
    _
  $region25: #{bert_embedder_forward.7} parent=0 // pred_fallthru
    _
  // Predicated region
  $region26: #{bert_embedder_forward.7} parent=0 // pred_check
    _
  $region27: #{bert_embedder_forward.7} parent=0 // pred_check_branch
    %25 = sbr.rel (0) target = $region29
  $region28: #{bert_embedder_forward.7} parent=0 // pred_region
    _
  $region29: #{bert_embedder_forward.7} parent=0 // pred_fallthru
    _
  %v27 = vld [vmem:[%s0] sm:$0xf]
  %v28 = vld [vmem:[%s0 + $0x4] sm:$0xf]
  %v29 = vld [vmem:[%s1] sm:$0xf]
  %v30 = vld [vmem:[%s1 + $0x4] sm:$0xf]
  %v31 = vld [vmem:[%s1 + $0x8] sm:$0xf]
  %v32 = vld [vmem:[%s1 + $0xc] sm:$0xf]
  %v33 = vld [vmem:[%s2] sm:$0x1]
  %v35 = vlaneseq
  %v36 = vshrl.u32 %v35, 7
  %v37 = vsub.s32 0, %v36
  %v38 = vrot.slane %v33, %v37
  %v42 = vunpack.c.l.b16 %v27
  %v43 = vunpack.c.l.b16 %v28
  %v44 = vpack.c.b16 %v43, %v42
  %v49 = vunpack.c.l.b16 %v29
  %v50 = vunpack.c.l.b16 %v30
  %v51 = vunpack.c.l.b16 %v31
  %v52 = vunpack.c.l.b16 %v32
  %v53 = vpack.c.b16 %v50, %v49
  %v54 = vpack.c.b16 %v52, %v51
  %vm57 = vcmask 261120
  %v59 = vsel %vm57, %v44, 0
  %61 = vmatprep.subr.bf16.mxu0 0
  %62 = vmatpush1.bf16.msra.mxu0 %v53
  %63 = vmatprep.subr.bf16.mxu0 0
  %64 = vmatpush1.bf16.msra.mxu0 %v54
  %65 = vmatprep.subr.bf16.mxu0 0
  %66 = vmatpush1.bf16.msra.mxu0 0
  %67 = vmatprep.subr.bf16.mxu0 0
  %68 = vmatpush1.bf16.msra.mxu0 0
  %69 = vmatprep.subr.bf16.mxu0 0
  %70 = vmatpush1.bf16.msra.mxu0 0
  %71 = vmatprep.subr.bf16.mxu0 0
  %72 = vmatpush1.bf16.msra.mxu0 0
  %73 = vmatprep.subr.bf16.mxu0 0
  %74 = vmatpush1.bf16.msra.mxu0 0
  %75 = vmatprep.subr.bf16.mxu0 0
  %76 = vmatpush1.bf16.msra.mxu0 0
  %77 = vmatprep.subr.bf16.mxu0 0
  %78 = vmatpush1.bf16.msra.mxu0 0
  %79 = vmatprep.subr.bf16.mxu0 0
  %80 = vmatpush1.bf16.msra.mxu0 0
  %81 = vmatprep.subr.bf16.mxu0 0
  %82 = vmatpush1.bf16.msra.mxu0 0
  %83 = vmatprep.subr.bf16.mxu0 0
  %84 = vmatpush1.bf16.msra.mxu0 0
  %85 = vmatprep.subr.bf16.mxu0 0
  %86 = vmatpush1.bf16.msra.mxu0 0
  %87 = vmatprep.subr.bf16.mxu0 0
  %88 = vmatpush1.bf16.msra.mxu0 0
  %89 = vmatprep.subr.bf16.mxu0 0
  %90 = vmatpush1.bf16.msra.mxu0 0
  %91 = vmatprep.subr.bf16.mxu0 0
  %92 = vmatpush1.bf16.msra.mxu0 0
  %93 = vmatprep.mubr.bf16.mxu0 0
  %94 = vmatmul.mubr.bf16.gmra.mrb[0].mxu0 %v59
  %v95 = vpop.f32.mrb[0].mxu0
  %v96 = vadd.f32 %v38, %v95
  %v97 = vpop.f32.mrb[0].mxu0
  %v98 = vpop.f32.mrb[0].mxu0
  %v99 = vadd.f32 %v38, %v98
  %v100 = vpop.f32.mrb[0].mxu0
  %101 = vdwg.mxu0
  %v102 = vmul.f32 %v96, 0.5
  %v103 = vmul.f32 %v99, 0.5
  %v104 = vmul.f32 %v96, 0.044715
  %v105 = vmul.f32 %v99, 0.044715
  %v106 = vmul.f32 %v104, %v96
  %v107 = vmul.f32 %v105, %v99
  %v108 = vmul.f32 %v106, %v96
  %v109 = vmul.f32 %v107, %v99
  %v110 = vadd.f32 %v96, %v108
  %v111 = vadd.f32 %v99, %v109
  %v112 = vmul.f32 %v110, 0.7978846
  %v113 = vmul.f32 %v111, 0.7978846
  %v114 = vtanh.pop %v112
  %v115 = vtanh.pop %v113
  %v116 = vadd.f32 %v114, 1.0
  %v117 = vadd.f32 %v115, 1.0
  %v118 = vmul.f32 %v102, %v116
  %v119 = vmul.f32 %v103, %v117
  %v120 = vpack.c.bf16 %v119, %v118
  %v121 = vld [vmem:[%s3] sm:$0xf]
  %v122 = vld [vmem:[%s3 + $0x4] sm:$0xf]
  %v123 = vld [vmem:[%s3 + $0x8] sm:$0xf]
  %v124 = vld [vmem:[%s3 + $0xc] sm:$0xf]
  %v125 = vld [vmem:[%s3 + $0x10] sm:$0xf]
  %v126 = vld [vmem:[%s3 + $0x14] sm:$0xf]
  %v127 = vld [vmem:[%s3 + $0x18] sm:$0xf]
  %v128 = vld [vmem:[%s3 + $0x1c] sm:$0xf]
  %v129 = vld [vmem:[%s4] sm:$0x1]
  %v131 = vlaneseq
  %v132 = vshrl.u32 %v131, 7
  %v133 = vsub.s32 0, %v132
  %v134 = vrot.slane %v129, %v133
  %v144 = vunpack.c.l.b16 %v121
  %v145 = vunpack.c.l.b16 %v122
  %v146 = vunpack.c.l.b16 %v123
  %v147 = vunpack.c.l.b16 %v124
  %v148 = vunpack.c.l.b16 %v125
  %v149 = vunpack.c.l.b16 %v126
  %v150 = vunpack.c.l.b16 %v127
  %v151 = vunpack.c.l.b16 %v128
  %v152 = vpack.c.b16 %v145, %v144
  %v153 = vpack.c.b16 %v147, %v146
  %v154 = vpack.c.b16 %v149, %v148
  %v155 = vpack.c.b16 %v151, %v150
  %vm160 = vcmask 523264
  %v162 = vsel %vm160, %v120, 0
  %164 = vmatprep.subr.bf16.mxu0 0
  %165 = vmatpush1.bf16.msra.mxu0 %v152
  %166 = vmatprep.subr.bf16.mxu0 0
  %167 = vmatpush1.bf16.msra.mxu0 %v153
  %168 = vmatprep.subr.bf16.mxu0 0
  %169 = vmatpush1.bf16.msra.mxu0 %v154
  %170 = vmatprep.subr.bf16.mxu0 0
  %171 = vmatpush1.bf16.msra.mxu0 %v155
  %172 = vmatprep.subr.bf16.mxu0 0
  %173 = vmatpush1.bf16.msra.mxu0 0
  %174 = vmatprep.subr.bf16.mxu0 0
  %175 = vmatpush1.bf16.msra.mxu0 0
  %176 = vmatprep.subr.bf16.mxu0 0
  %177 = vmatpush1.bf16.msra.mxu0 0
  %178 = vmatprep.subr.bf16.mxu0 0
  %179 = vmatpush1.bf16.msra.mxu0 0
  %180 = vmatprep.subr.bf16.mxu0 0
  %181 = vmatpush1.bf16.msra.mxu0 0
  %182 = vmatprep.subr.bf16.mxu0 0
  %183 = vmatpush1.bf16.msra.mxu0 0
  %184 = vmatprep.subr.bf16.mxu0 0
  %185 = vmatpush1.bf16.msra.mxu0 0
  %186 = vmatprep.subr.bf16.mxu0 0
  %187 = vmatpush1.bf16.msra.mxu0 0
  %188 = vmatprep.subr.bf16.mxu0 0
  %189 = vmatpush1.bf16.msra.mxu0 0
  %190 = vmatprep.subr.bf16.mxu0 0
  %191 = vmatpush1.bf16.msra.mxu0 0
  %192 = vmatprep.subr.bf16.mxu0 0
  %193 = vmatpush1.bf16.msra.mxu0 0
  %194 = vmatprep.subr.bf16.mxu0 0
  %195 = vmatpush1.bf16.msra.mxu0 0
  %196 = vmatprep.mubr.bf16.mxu0 0
  %197 = vmatmul.mubr.bf16.gmra.mrb[0].mxu0 %v162
  %v198 = vpop.f32.mrb[0].mxu0
  %v199 = vadd.f32 %v134, %v198
  %v200 = vpop.f32.mrb[0].mxu0
  %v201 = vpop.f32.mrb[0].mxu0
  %v202 = vadd.f32 %v134, %v201
  %v203 = vpop.f32.mrb[0].mxu0
  %204 = vdwg.mxu0
  %v205 = vunpack.c.l.bf16 %v27
  %v206 = vunpack.c.l.bf16 %v28
  %v207 = vadd.f32 %v199, %v205
  %v208 = vadd.f32 %v202, %v206
  %v209 = vsel %vm57, %v207, 0.0
  %210 = vadd.xlane.f32.xlu0 %v209
  %v211 = vpop.xlane.xlu0 %210
  %v212 = vsel %vm57, %v208, 0.0
  %213 = vadd.xlane.f32.xlu0 %v212
  %v214 = vpop.xlane.xlu0 %213
  %v215 = vrcp.pop 32.0
  %v216 = vmul.f32 %v211, %v215
  %v217 = vmul.f32 %v214, %v215
  %v218 = vsub.f32 %v207, %v216
  %v219 = vsub.f32 %v208, %v217
  %v220 = vmul.f32 %v218, %v218
  %v221 = vmul.f32 %v219, %v219
  %v222 = vsel %vm57, %v220, 0.0
  %223 = vadd.xlane.f32.xlu0 %v222
  %v224 = vpop.xlane.xlu0 %223
  %v225 = vsel %vm57, %v221, 0.0
  %226 = vadd.xlane.f32.xlu0 %v225
  %v227 = vpop.xlane.xlu0 %226
  %v228 = vmul.f32 %v224, %v215
  %v229 = vmul.f32 %v227, %v215
  %v230 = vadd.f32 %v228, 1e-12
  %v231 = vadd.f32 %v229, 1e-12
  %v232 = vrsqrt.pop %v230
  %v233 = vrsqrt.pop %v231
  %v234 = vmul.f32 %v218, %v232
  %v235 = vmul.f32 %v219, %v233
  %v236 = vld [vmem:[%s5] sm:$0x1]
  %v238 = vlaneseq
  %v239 = vshrl.u32 %v238, 7
  %v240 = vsub.s32 0, %v239
  %v241 = vrot.slane %v236, %v240
  %v243 = vmul.f32 %v234, %v241
  %v244 = vmul.f32 %v235, %v241
  %v245 = vld [vmem:[%s6] sm:$0x1]
  %v247 = vlaneseq
  %v248 = vshrl.u32 %v247, 7
  %v249 = vsub.s32 0, %v248
  %v250 = vrot.slane %v245, %v249
  %v252 = vadd.f32 %v243, %v250
  %v253 = vadd.f32 %v244, %v250
  %v254 = vpack.c.bf16 %v253, %v252
  %v256 = vunpack.c.l.b16 %v254
  %v257 = vunpack.c.h.b16 %v254
  %v258 = vpack.c.b16 %v256, %v256
  %v259 = vpack.c.b16 %v257, %v257
  %vm262 = vcmask 257024
  %263 = vst.msk [vmem:[%s7] sm:$0xf] %vm262, %v258
  %264 = vst.msk [vmem:[%s7 + $0x4] sm:$0xf] %vm262, %v259
  // Predicated region
  $region30: #{bert_embedder_forward.7} parent=0 // pred_check
    _
  $region31: #{bert_embedder_forward.7} parent=0 // pred_check_branch
    %266 = sbr.rel (0) target = $region33
  $region32: #{bert_embedder_forward.7} parent=0 // pred_region
    _
  $region33: #{bert_embedder_forward.7} parent=0 // pred_fallthru
    _
  // Predicated region
  $region34: #{bert_embedder_forward.7} parent=0 // pred_check
    _
  $region35: #{bert_embedder_forward.7} parent=0 // pred_check_branch
    %268 = sbr.rel (0) target = $region37
  $region36: #{bert_embedder_forward.7} parent=0 // pred_region
    _
  $region37: #{bert_embedder_forward.7} parent=0 // pred_fallthru
    _

// kernel: bert_embedder_forward.6
$region0: #{bert_embedder_forward.6}
  #allocation0 [shape = 'u32[]', space=smem, size = 0x4, offset = 0x4, fixed_abs, tag = 'smem constant byte address 0x4 - core index']
  #allocation1 [shape = 'u32[144,128]{1,0:T(1,128)}', space=vmem, size = 0x12000, scoped, tag = 'internal scratch']
  %s0 = inlined_call_operand.vmem [shape: bf16[2,8,32], index: 0, kind: input, shape index: {}]
  %s1 = inlined_call_operand.vmem [shape: bf16[32,96], index: 1, kind: input, shape index: {}]
  %s2 = inlined_call_operand.vmem [shape: f32[1,96], index: 2, kind: input, shape index: {}]
  %s3 = inlined_call_operand.vmem [shape: bf16[32,32], index: 3, kind: input, shape index: {}]
  %s4 = inlined_call_operand.vmem [shape: f32[1,32], index: 4, kind: input, shape index: {}]
  %s5 = inlined_call_operand.vmem [shape: f32[1,32], index: 5, kind: input, shape index: {}]
  %s6 = inlined_call_operand.vmem [shape: f32[1,32], index: 6, kind: input, shape index: {}]
  %s7 = inlined_call_operand.vmem [shape: f32[2,1,8], index: 7, kind: input, shape index: {}]
  %s8 = inlined_call_operand.vmem [shape: bf16[2,8,32], index: 8, kind: output, shape index: {}]
  %s9 = sld [smem:[#allocation0]]
  $region65: #{bert_embedder_forward.6} parent=0
    _
  %s11 = ssub.s32 1, %s9
  %s12 = scalar_select 0, %s11, %s9
  loop: start=0, step=1, limit=4
  $region2: #{bert_embedder_forward.6} parent=0 // loop_pre_header
    _
  $region3: #{bert_embedder_forward.6} parent=0 // loop_header
    %s14 = sphi 0, %s18
    %p15 = scmp.ge.s32.totalorder %s14, 4
    %s24 = sphi 0, %s26
    %s27 = sphi 0, %s24
    %s28 = sphi 0, %s27
    %s44 = sphi 0, %s28
    %s48 = sphi 0, %s48
    %s50 = sphi 0, %s48
    %s51 = sphi 0, %s50
    %s65 = sphi 0, %s51
    %s69 = sphi 0, %s69
    %s71 = sphi 0, %s69
    %s72 = sphi 0, %s71
    %s86 = sphi 0, %s72
    %s90 = sphi 0, %s90
    %s92 = sphi 0, %s90
    %s93 = sphi 0, %s92
    %s107 = sphi 0, %s93
    %s111 = sphi 0, %s111
    %s113 = sphi 0, %s111
    %s114 = sphi 0, %s113
    %s128 = sphi 0, %s114
    %s132 = sphi 0, %s132
    %s134 = sphi 0, %s132
    %s135 = sphi 0, %s134
    %s149 = sphi 0, %s135
    %s153 = sphi 0, %s153
    %s155 = sphi 0, %s153
    %s156 = sphi 0, %s155
    %s170 = sphi 0, %s156
    %s176 = sphi 0, %s178
    %s179 = sphi 0, %s176
    %s180 = sphi 0, %s179
    %s196 = sphi 0, %s180
    %s202 = sphi 0, %s204
    %s205 = sphi 0, %s202
    %s206 = sphi 0, %s205
    %s222 = sphi 0, %s206
  $region4: #{bert_embedder_forward.6} parent=0 // loop_header_branch
    %17 = sbr.rel (%p15) target = $region8
  $region5: #{bert_embedder_forward.6} parent=0 // loop_body
    %s19 = ssub.s32 %s14, 1
    %s20 = ssub.s32 %s14, 2
    %s21 = sadd.s32 %s14, 1
    %s22 = ssub.s32 %s14, %s21
    %p23 = scmp.eq.s32.totalorder %s22, 0
    %s25 = sadd.s32 %s24, 1
    %s26 = scalar_select %p23, %s24, %s25
    %p29 = pneg %p23
    %p30 = scmp.eq.s32.totalorder %s14, 1
    %p31 = por %p29, %p30
    %p32 = scmp.ne.s32.totalorder %s24, %s27
    %p33 = scmp.eq.s32.totalorder %s14, 0
    %p34 = por %p32, %p33
    %p35 = scmp.ne.s32.totalorder %s24, %s27
    %p36 = scmp.eq.s32.totalorder %s19, 1
    %p37 = por %p35, %p36
    %p38 = scmp.ne.s32.totalorder %s27, %s28
    %p39 = scmp.eq.s32.totalorder %s19, 0
    %p40 = por %p38, %p39
    %p41 = scmp.ne.s32.totalorder %s27, %s28
    %p42 = scmp.eq.s32.totalorder %s20, 1
    %p43 = por %p41, %p42
    %p45 = scmp.ne.s32.totalorder %s28, %s44
    %p46 = scmp.eq.s32.totalorder %s20, 0
    %p47 = por %p45, %p46
    %s49 = sadd.s32 %s48, 1
    %p52 = scmp.eq.s32.totalorder %s14, 1
    %p53 = scmp.ne.s32.totalorder %s48, %s50
    %p54 = scmp.eq.s32.totalorder %s14, 0
    %p55 = por %p53, %p54
    %p56 = scmp.ne.s32.totalorder %s48, %s50
    %p57 = scmp.eq.s32.totalorder %s19, 1
    %p58 = por %p56, %p57
    %p59 = scmp.ne.s32.totalorder %s50, %s51
    %p60 = scmp.eq.s32.totalorder %s19, 0
    %p61 = por %p59, %p60
    %p62 = scmp.ne.s32.totalorder %s50, %s51
    %p63 = scmp.eq.s32.totalorder %s20, 1
    %p64 = por %p62, %p63
    %p66 = scmp.ne.s32.totalorder %s51, %s65
    %p67 = scmp.eq.s32.totalorder %s20, 0
    %p68 = por %p66, %p67
    %s70 = sadd.s32 %s69, 1
    %p73 = scmp.eq.s32.totalorder %s14, 1
    %p74 = scmp.ne.s32.totalorder %s69, %s71
    %p75 = scmp.eq.s32.totalorder %s14, 0
    %p76 = por %p74, %p75
    %p77 = scmp.ne.s32.totalorder %s69, %s71
    %p78 = scmp.eq.s32.totalorder %s19, 1
    %p79 = por %p77, %p78
    %p80 = scmp.ne.s32.totalorder %s71, %s72
    %p81 = scmp.eq.s32.totalorder %s19, 0
    %p82 = por %p80, %p81
    %p83 = scmp.ne.s32.totalorder %s71, %s72
    %p84 = scmp.eq.s32.totalorder %s20, 1
    %p85 = por %p83, %p84
    %p87 = scmp.ne.s32.totalorder %s72, %s86
    %p88 = scmp.eq.s32.totalorder %s20, 0
    %p89 = por %p87, %p88
    %s91 = sadd.s32 %s90, 1
    %p94 = scmp.eq.s32.totalorder %s14, 1
    %p95 = scmp.ne.s32.totalorder %s90, %s92
    %p96 = scmp.eq.s32.totalorder %s14, 0
    %p97 = por %p95, %p96
    %p98 = scmp.ne.s32.totalorder %s90, %s92
    %p99 = scmp.eq.s32.totalorder %s19, 1
    %p100 = por %p98, %p99
    %p101 = scmp.ne.s32.totalorder %s92, %s93
    %p102 = scmp.eq.s32.totalorder %s19, 0
    %p103 = por %p101, %p102
    %p104 = scmp.ne.s32.totalorder %s92, %s93
    %p105 = scmp.eq.s32.totalorder %s20, 1
    %p106 = por %p104, %p105
    %p108 = scmp.ne.s32.totalorder %s93, %s107
    %p109 = scmp.eq.s32.totalorder %s20, 0
    %p110 = por %p108, %p109
    %s112 = sadd.s32 %s111, 1
    %p115 = scmp.eq.s32.totalorder %s14, 1
    %p116 = scmp.ne.s32.totalorder %s111, %s113
    %p117 = scmp.eq.s32.totalorder %s14, 0
    %p118 = por %p116, %p117
    %p119 = scmp.ne.s32.totalorder %s111, %s113
    %p120 = scmp.eq.s32.totalorder %s19, 1
    %p121 = por %p119, %p120
    %p122 = scmp.ne.s32.totalorder %s113, %s114
    %p123 = scmp.eq.s32.totalorder %s19, 0
    %p124 = por %p122, %p123
    %p125 = scmp.ne.s32.totalorder %s113, %s114
    %p126 = scmp.eq.s32.totalorder %s20, 1
    %p127 = por %p125, %p126
    %p129 = scmp.ne.s32.totalorder %s114, %s128
    %p130 = scmp.eq.s32.totalorder %s20, 0
    %p131 = por %p129, %p130
    %s133 = sadd.s32 %s132, 1
    %p136 = scmp.eq.s32.totalorder %s14, 1
    %p137 = scmp.ne.s32.totalorder %s132, %s134
    %p138 = scmp.eq.s32.totalorder %s14, 0
    %p139 = por %p137, %p138
    %p140 = scmp.ne.s32.totalorder %s132, %s134
    %p141 = scmp.eq.s32.totalorder %s19, 1
    %p142 = por %p140, %p141
    %p143 = scmp.ne.s32.totalorder %s134, %s135
    %p144 = scmp.eq.s32.totalorder %s19, 0
    %p145 = por %p143, %p144
    %p146 = scmp.ne.s32.totalorder %s134, %s135
    %p147 = scmp.eq.s32.totalorder %s20, 1
    %p148 = por %p146, %p147
    %p150 = scmp.ne.s32.totalorder %s135, %s149
    %p151 = scmp.eq.s32.totalorder %s20, 0
    %p152 = por %p150, %p151
    %s154 = sadd.s32 %s153, 1
    %p157 = scmp.eq.s32.totalorder %s14, 1
    %p158 = scmp.ne.s32.totalorder %s153, %s155
    %p159 = scmp.eq.s32.totalorder %s14, 0
    %p160 = por %p158, %p159
    %p161 = scmp.ne.s32.totalorder %s153, %s155
    %p162 = scmp.eq.s32.totalorder %s19, 1
    %p163 = por %p161, %p162
    %p164 = scmp.ne.s32.totalorder %s155, %s156
    %p165 = scmp.eq.s32.totalorder %s19, 0
    %p166 = por %p164, %p165
    %p167 = scmp.ne.s32.totalorder %s155, %s156
    %p168 = scmp.eq.s32.totalorder %s20, 1
    %p169 = por %p167, %p168
    %p171 = scmp.ne.s32.totalorder %s156, %s170
    %p172 = scmp.eq.s32.totalorder %s20, 0
    %p173 = por %p171, %p172
    %s174 = ssub.s32 %s14, %s21
    %p175 = scmp.eq.s32.totalorder %s174, 0
    %s177 = sadd.s32 %s176, 1
    %s178 = scalar_select %p175, %s176, %s177
    %p181 = pneg %p175
    %p182 = scmp.eq.s32.totalorder %s14, 1
    %p183 = por %p181, %p182
    %p184 = scmp.ne.s32.totalorder %s176, %s179
    %p185 = scmp.eq.s32.totalorder %s14, 0
    %p186 = por %p184, %p185
    %p187 = scmp.ne.s32.totalorder %s176, %s179
    %p188 = scmp.eq.s32.totalorder %s19, 1
    %p189 = por %p187, %p188
    %p190 = scmp.ne.s32.totalorder %s179, %s180
    %p191 = scmp.eq.s32.totalorder %s19, 0
    %p192 = por %p190, %p191
    %p193 = scmp.ne.s32.totalorder %s179, %s180
    %p194 = scmp.eq.s32.totalorder %s20, 1
    %p195 = por %p193, %p194
    %p197 = scmp.ne.s32.totalorder %s180, %s196
    %p198 = scmp.eq.s32.totalorder %s20, 0
    %p199 = por %p197, %p198
    %s200 = ssub.s32 %s14, %s21
    %p201 = scmp.eq.s32.totalorder %s200, 0
    %s203 = sadd.s32 %s202, 1
    %s204 = scalar_select %p201, %s202, %s203
    %p207 = pneg %p201
    %p208 = scmp.eq.s32.totalorder %s14, 1
    %p209 = por %p207, %p208
    %p210 = scmp.ne.s32.totalorder %s202, %s205
    %p211 = scmp.eq.s32.totalorder %s14, 0
    %p212 = por %p210, %p211
    %p213 = scmp.ne.s32.totalorder %s202, %s205
    %p214 = scmp.eq.s32.totalorder %s19, 1
    %p215 = por %p213, %p214
    %p216 = scmp.ne.s32.totalorder %s205, %s206
    %p217 = scmp.eq.s32.totalorder %s19, 0
    %p218 = por %p216, %p217
    %p219 = scmp.ne.s32.totalorder %s205, %s206
    %p220 = scmp.eq.s32.totalorder %s20, 1
    %p221 = por %p219, %p220
    %p223 = scmp.ne.s32.totalorder %s206, %s222
    %p224 = scmp.eq.s32.totalorder %s20, 0
    %p225 = por %p223, %p224
    %p226 = scmp.le.s32.totalorder 1, %s14
    %p227 = scmp.lt.s32.totalorder %s14, 3
    %p228 = pnand %p226, %p227
    %p229 = pneg %p228
    // Predicated region
    $region9: #{bert_embedder_forward.6} parent=5 // pred_check
      _
    $region10: #{bert_embedder_forward.6} parent=5 // pred_check_branch
      %231 = sbr.rel (%p228) target = $region12
    $region11: #{bert_embedder_forward.6} parent=5 // pred_region
      %s232 = ssub.s32 %s14, 1
      // Predicated region
      $region13: #{bert_embedder_forward.6} parent=11 // pred_check
        %p233 = pneg %p61
      $region14: #{bert_embedder_forward.6} parent=11 // pred_check_branch
        %235 = sbr.rel (%p233) target = $region16
      $region15: #{bert_embedder_forward.6} parent=11 // pred_region
        _
      $region16: #{bert_embedder_forward.6} parent=11 // pred_fallthru
        _
      // Predicated region
      $region17: #{bert_embedder_forward.6} parent=11 // pred_check
        %p236 = pneg %p82
      $region18: #{bert_embedder_forward.6} parent=11 // pred_check_branch
        %238 = sbr.rel (%p236) target = $region20
      $region19: #{bert_embedder_forward.6} parent=11 // pred_region
        _
      $region20: #{bert_embedder_forward.6} parent=11 // pred_fallthru
        _
      // Predicated region
      $region21: #{bert_embedder_forward.6} parent=11 // pred_check
        %p239 = pneg %p103
      $region22: #{bert_embedder_forward.6} parent=11 // pred_check_branch
        %241 = sbr.rel (%p239) target = $region24
      $region23: #{bert_embedder_forward.6} parent=11 // pred_region
        _
      $region24: #{bert_embedder_forward.6} parent=11 // pred_fallthru
        _
      // Predicated region
      $region25: #{bert_embedder_forward.6} parent=11 // pred_check
        %p242 = pneg %p124
      $region26: #{bert_embedder_forward.6} parent=11 // pred_check_branch
        %244 = sbr.rel (%p242) target = $region28
      $region27: #{bert_embedder_forward.6} parent=11 // pred_region
        _
      $region28: #{bert_embedder_forward.6} parent=11 // pred_fallthru
        _
      // Predicated region
      $region29: #{bert_embedder_forward.6} parent=11 // pred_check
        %p245 = pneg %p145
      $region30: #{bert_embedder_forward.6} parent=11 // pred_check_branch
        %247 = sbr.rel (%p245) target = $region32
      $region31: #{bert_embedder_forward.6} parent=11 // pred_region
        _
      $region32: #{bert_embedder_forward.6} parent=11 // pred_fallthru
        _
      // Predicated region
      $region33: #{bert_embedder_forward.6} parent=11 // pred_check
        %p248 = pneg %p166
      $region34: #{bert_embedder_forward.6} parent=11 // pred_check_branch
        %250 = sbr.rel (%p248) target = $region36
      $region35: #{bert_embedder_forward.6} parent=11 // pred_region
        _
      $region36: #{bert_embedder_forward.6} parent=11 // pred_fallthru
        _
    $region12: #{bert_embedder_forward.6} parent=5 // pred_fallthru
      _
    %p251 = scmp.lt.s32.totalorder %s14, 2
    // Predicated region
    $region37: #{bert_embedder_forward.6} parent=5 // pred_check
      %p252 = pneg %p251
    $region38: #{bert_embedder_forward.6} parent=5 // pred_check_branch
      %254 = sbr.rel (%p252) target = $region40
    $region39: #{bert_embedder_forward.6} parent=5 // pred_region
      // Predicated region
      $region41: #{bert_embedder_forward.6} parent=39 // pred_check
        %p255 = pneg %p34
      $region42: #{bert_embedder_forward.6} parent=39 // pred_check_branch
        %257 = sbr.rel (%p255) target = $region44
      $region43: #{bert_embedder_forward.6} parent=39 // pred_region
        %p258 = scmp.lt.s32.totalorder %s14, 1
        %s259 = scalar_select %p258, %s14, 1
        %s260 = smul.addr %s259, 4
        %s261 = scalar_lea.vmem %s0, %s260
      $region44: #{bert_embedder_forward.6} parent=39 // pred_fallthru
        _
      // Predicated region
      $region45: #{bert_embedder_forward.6} parent=39 // pred_check
        %p262 = pneg %p186
      $region46: #{bert_embedder_forward.6} parent=39 // pred_check_branch
        %264 = sbr.rel (%p262) target = $region48
      $region47: #{bert_embedder_forward.6} parent=39 // pred_region
        %p265 = scmp.lt.s32.totalorder %s14, 1
        %s266 = scalar_select %p265, %s14, 1
        %s267 = scalar_lea.vmem %s7, %s266
      $region48: #{bert_embedder_forward.6} parent=39 // pred_fallthru
        _
    $region40: #{bert_embedder_forward.6} parent=5 // pred_fallthru
      _
    %p268 = scmp.le.s32.totalorder 1, %s14
    %p269 = scmp.lt.s32.totalorder %s14, 3
    %p270 = pnand %p268, %p269
    %p271 = pneg %p270
    // Predicated region
    $region49: #{bert_embedder_forward.6} parent=5 // pred_check
      _
    $region50: #{bert_embedder_forward.6} parent=5 // pred_check_branch
      %273 = sbr.rel (%p270) target = $region52
    $region51: #{bert_embedder_forward.6} parent=5 // pred_region
      %s274 = ssub.s32 %s14, 1
      %p275 = scmp.lt.s32.totalorder %s19, 1
      %s276 = scalar_select %p275, %s19, 1
      %s277 = smul.addr %s276, 4
      %s278 = scalar_lea.vmem %s0, %s277
      %p279 = pneg %p40
      %p280 = pneg %p37
      %p281 = pneg %p61
      %p282 = pneg %p58
      %p283 = pneg %p82
      %p284 = pneg %p79
      %p285 = pneg %p103
      %p286 = pneg %p100
      %p287 = pneg %p124
      %p288 = pneg %p121
      %p289 = pneg %p145
      %p290 = pneg %p142
      %p291 = pneg %p166
      %p292 = pneg %p163
      %p293 = scmp.lt.s32.totalorder %s19, 1
      %s294 = scalar_select %p293, %s19, 1
      %s295 = scalar_lea.vmem %s7, %s294
      %p296 = pneg %p192
      %p297 = pneg %p189
      %p298 = pneg %p218
      %p299 = pneg %p215
      %p300 = scmp.lt.s32.totalorder %s19, 1
      %s301 = scalar_select %p300, %s19, 1
      %s302 = smul.addr %s301, 4
      %s303 = scalar_lea.vmem %s8, %s302
      %p304 = scmp.lt.s32.totalorder %s19, 1
      %s305 = scalar_select %p304, %s19, 1
      %s306 = smul.addr %s305, 4
      %s307 = scalar_lea.vmem %s0, %s306
      %p308 = scmp.lt.s32.totalorder %s19, 1
      %s309 = scalar_select %p308, %s19, 1
      %s310 = scalar_lea.vmem %s7, %s309
      %p311 = scmp.lt.s32.totalorder %s19, 1
      %s312 = scalar_select %p311, %s19, 1
      %s313 = smul.addr %s312, 4
      %s314 = scalar_lea.vmem %s8, %s313
      %v316 = vld [vmem:[%s307] sm:$0xf]
      %v317 = vld [vmem:[%s1] sm:$0xf]
      %v318 = vld [vmem:[%s1 + $0x4] sm:$0xf]
      %v319 = vld [vmem:[%s1 + $0x8] sm:$0xf]
      %v320 = vld [vmem:[%s1 + $0xc] sm:$0xf]
      %v321 = vld [vmem:[%s2] sm:$0x1]
      %v323 = vlaneseq
      %v324 = vshrl.u32 %v323, 7
      %v325 = vsub.s32 0, %v324
      %v326 = vrot.slane %v321, %v325
      %v332 = vunpack.c.l.b16 %v317
      %v333 = vunpack.c.l.b16 %v318
      %v334 = vunpack.c.l.b16 %v319
      %v335 = vunpack.c.l.b16 %v320
      %v336 = vpack.c.b16 %v333, %v332
      %v337 = vpack.c.b16 %v335, %v334
      %vm340 = vcmask 261120
      %v342 = vsel %vm340, %v316, 0
      %344 = vmatprep.subr.bf16.mxu0 0
      %345 = vmatpush1.bf16.msra.mxu0 %v336
      %346 = vmatprep.subr.bf16.mxu0 0
      %347 = vmatpush1.bf16.msra.mxu0 %v337
      %348 = vmatprep.subr.bf16.mxu0 0
      %349 = vmatpush1.bf16.msra.mxu0 0
      %350 = vmatprep.subr.bf16.mxu0 0
      %351 = vmatpush1.bf16.msra.mxu0 0
      %352 = vmatprep.subr.bf16.mxu0 0
      %353 = vmatpush1.bf16.msra.mxu0 0
      %354 = vmatprep.subr.bf16.mxu0 0
      %355 = vmatpush1.bf16.msra.mxu0 0
      %356 = vmatprep.subr.bf16.mxu0 0
      %357 = vmatpush1.bf16.msra.mxu0 0
      %358 = vmatprep.subr.bf16.mxu0 0
      %359 = vmatpush1.bf16.msra.mxu0 0
      %360 = vmatprep.subr.bf16.mxu0 0
      %361 = vmatpush1.bf16.msra.mxu0 0
      %362 = vmatprep.subr.bf16.mxu0 0
      %363 = vmatpush1.bf16.msra.mxu0 0
      %364 = vmatprep.subr.bf16.mxu0 0
      %365 = vmatpush1.bf16.msra.mxu0 0
      %366 = vmatprep.subr.bf16.mxu0 0
      %367 = vmatpush1.bf16.msra.mxu0 0
      %368 = vmatprep.subr.bf16.mxu0 0
      %369 = vmatpush1.bf16.msra.mxu0 0
      %370 = vmatprep.subr.bf16.mxu0 0
      %371 = vmatpush1.bf16.msra.mxu0 0
      %372 = vmatprep.subr.bf16.mxu0 0
      %373 = vmatpush1.bf16.msra.mxu0 0
      %374 = vmatprep.subr.bf16.mxu0 0
      %375 = vmatpush1.bf16.msra.mxu0 0
      %376 = vmatprep.mubr.bf16.mxu0 0
      %377 = vmatmul.mubr.bf16.gmra.mrb[0].mxu0 %v342
      %v378 = vpop.f32.mrb[0].mxu0
      %v379 = vadd.f32 %v326, %v378
      %v380 = vpop.f32.mrb[0].mxu0
      %v381 = vpop.f32.mrb[0].mxu0
      %v382 = vpop.f32.mrb[0].mxu0
      %383 = vdwg.mxu0
      %v384 = vld [vmem:[%s310] sm:$0x1]
      %v386 = vlaneseq
      %v387 = vshrl.u32 %v386, 7
      %v388 = vsub.s32 0, %v387
      %v389 = vrot.slane %v384, %v388
      %392 = vrot.lane.b32.xlu0 %v379, 96
      %v393 = vpop.permute.xlu0 %392
      %vm394 = vcmask 130048
      %v395 = vsel %vm394, %v379, 0
      %v397 = vsel %vm394, %v393, 0
      %399 = vmatprep.subr.mxu0 0.0
      %400 = vmatpush1.xpose.msra.mxu0 %v397
      %401 = vmatprep.subr.mxu0 0.0
      %402 = vmatpush1.xpose.msra.mxu0 0.0
      %403 = vmatprep.subr.mxu0 0.0
      %404 = vmatpush1.xpose.msra.mxu0 0.0
      %405 = vmatprep.subr.mxu0 0.0
      %406 = vmatpush1.xpose.msra.mxu0 0.0
      %407 = vmatprep.subr.mxu0 0.0
      %408 = vmatpush1.xpose.msra.mxu0 0.0
      %409 = vmatprep.subr.mxu0 0.0
      %410 = vmatpush1.xpose.msra.mxu0 0.0
      %411 = vmatprep.subr.mxu0 0.0
      %412 = vmatpush1.xpose.msra.mxu0 0.0
      %413 = vmatprep.subr.mxu0 0.0
      %414 = vmatpush1.xpose.msra.mxu0 0.0
      %415 = vmatprep.subr.mxu0 0.0
      %416 = vmatpush1.xpose.msra.mxu0 0.0
      %417 = vmatprep.subr.mxu0 0.0
      %418 = vmatpush1.xpose.msra.mxu0 0.0
      %419 = vmatprep.subr.mxu0 0.0
      %420 = vmatpush1.xpose.msra.mxu0 0.0
      %421 = vmatprep.subr.mxu0 0.0
      %422 = vmatpush1.xpose.msra.mxu0 0.0
      %423 = vmatprep.subr.mxu0 0.0
      %424 = vmatpush1.xpose.msra.mxu0 0.0
      %425 = vmatprep.subr.mxu0 0.0
      %426 = vmatpush1.xpose.msra.mxu0 0.0
      %427 = vmatprep.subr.mxu0 0.0
      %428 = vmatpush1.xpose.msra.mxu0 0.0
      %429 = vmatprep.subr.mxu0 0.0
      %430 = vmatpush1.xpose.msra.mxu0 0.0
      %431 = vmatprep.subr.mxu0 0.0
      %432 = vmatpush1.xpose.msra.mxu0 0.0
      %433 = vmatprep.subr.mxu0 0.0
      %434 = vmatpush1.xpose.msra.mxu0 0.0
      %435 = vmatprep.subr.mxu0 0.0
      %436 = vmatpush1.xpose.msra.mxu0 0.0
      %437 = vmatprep.subr.mxu0 0.0
      %438 = vmatpush1.xpose.msra.mxu0 0.0
      %439 = vmatprep.subr.mxu0 0.0
      %440 = vmatpush1.xpose.msra.mxu0 0.0
      %441 = vmatprep.subr.mxu0 0.0
      %442 = vmatpush1.xpose.msra.mxu0 0.0
      %443 = vmatprep.subr.mxu0 0.0
      %444 = vmatpush1.xpose.msra.mxu0 0.0
      %445 = vmatprep.subr.mxu0 0.0
      %446 = vmatpush1.xpose.msra.mxu0 0.0
      %447 = vmatprep.subr.mxu0 0.0
      %448 = vmatpush1.xpose.msra.mxu0 0.0
      %449 = vmatprep.subr.mxu0 0.0
      %450 = vmatpush1.xpose.msra.mxu0 0.0
      %451 = vmatprep.subr.mxu0 0.0
      %452 = vmatpush1.xpose.msra.mxu0 0.0
      %453 = vmatprep.subr.mxu0 0.0
      %454 = vmatpush1.xpose.msra.mxu0 0.0
      %455 = vmatprep.subr.mxu0 0.0
      %456 = vmatpush1.xpose.msra.mxu0 0.0
      %457 = vmatprep.subr.mxu0 0.0
      %458 = vmatpush1.xpose.msra.mxu0 0.0
      %459 = vmatprep.subr.mxu0 0.0
      %460 = vmatpush1.xpose.msra.mxu0 0.0
      %461 = vmatprep.subr.mxu0 0.0
      %462 = vmatpush1.xpose.msra.mxu0 0.0
      %463 = vmatprep.mubr.f32.mxu0 0.0
      %464 = vmatmul.mubr.f32.gmra.mrb[0].mxu0 %v395
      %v465 = vpop.f32.mrb[0].mxu0
      %v466 = vadd.f32 %v389, %v465
      %v467 = vpop.f32.mrb[0].mxu0
      %468 = vdwg.mxu0
      %vm469 = vcmask 64512
      %v470 = vsel %vm469, %v466, -inf
      %471 = vmax.xlane.f32.xlu0 %v470
      %v472 = vpop.xlane.xlu0 %471
      %v473 = vsub.f32 %v466, %v472
      %v474 = vmul.f32 %v473, 1.442695
      %v475 = vpow.pop %v474
      %v476 = vsel %vm469, %v475, 0.0
      %477 = vadd.xlane.f32.xlu0 %v476
      %v478 = vpop.xlane.xlu0 %477
      %v479 = vrcp.pop %v478
      %v480 = vmul.f32 %v475, %v479
      %481 = vrot.lane.b32.xlu0 %v379, 64
      %v482 = vpop.permute.xlu0 %481
      %v485 = vsel %vm469, %v480, 0
      %487 = vmatprep.subr.mxu0 0.0
      %488 = vmatpush1.msra.mxu0 %v482
      %489 = vmatprep.subr.mxu0 0.0
      %490 = vmatpush1.msra.mxu0 0.0
      %491 = vmatprep.subr.mxu0 0.0
      %492 = vmatpush1.msra.mxu0 0.0
      %493 = vmatprep.subr.mxu0 0.0
      %494 = vmatpush1.msra.mxu0 0.0
      %495 = vmatprep.subr.mxu0 0.0
      %496 = vmatpush1.msra.mxu0 0.0
      %497 = vmatprep.subr.mxu0 0.0
      %498 = vmatpush1.msra.mxu0 0.0
      %499 = vmatprep.subr.mxu0 0.0
      %500 = vmatpush1.msra.mxu0 0.0
      %501 = vmatprep.subr.mxu0 0.0
      %502 = vmatpush1.msra.mxu0 0.0
      %503 = vmatprep.subr.mxu0 0.0
      %504 = vmatpush1.msra.mxu0 0.0
      %505 = vmatprep.subr.mxu0 0.0
      %506 = vmatpush1.msra.mxu0 0.0
      %507 = vmatprep.subr.mxu0 0.0
      %508 = vmatpush1.msra.mxu0 0.0
      %509 = vmatprep.subr.mxu0 0.0
      %510 = vmatpush1.msra.mxu0 0.0
      %511 = vmatprep.subr.mxu0 0.0
      %512 = vmatpush1.msra.mxu0 0.0
      %513 = vmatprep.subr.mxu0 0.0
      %514 = vmatpush1.msra.mxu0 0.0
      %515 = vmatprep.subr.mxu0 0.0
      %516 = vmatpush1.msra.mxu0 0.0
      %517 = vmatprep.subr.mxu0 0.0
      %518 = vmatpush1.msra.mxu0 0.0
      %519 = vmatprep.subr.mxu0 0.0
      %520 = vmatpush1.msra.mxu0 0.0
      %521 = vmatprep.subr.mxu0 0.0
      %522 = vmatpush1.msra.mxu0 0.0
      %523 = vmatprep.subr.mxu0 0.0
      %524 = vmatpush1.msra.mxu0 0.0
      %525 = vmatprep.subr.mxu0 0.0
      %526 = vmatpush1.msra.mxu0 0.0
      %527 = vmatprep.subr.mxu0 0.0
      %528 = vmatpush1.msra.mxu0 0.0
      %529 = vmatprep.subr.mxu0 0.0
      %530 = vmatpush1.msra.mxu0 0.0
      %531 = vmatprep.subr.mxu0 0.0
      %532 = vmatpush1.msra.mxu0 0.0
      %533 = vmatprep.subr.mxu0 0.0
      %534 = vmatpush1.msra.mxu0 0.0
      %535 = vmatprep.subr.mxu0 0.0
      %536 = vmatpush1.msra.mxu0 0.0
      %537 = vmatprep.subr.mxu0 0.0
      %538 = vmatpush1.msra.mxu0 0.0
      %539 = vmatprep.subr.mxu0 0.0
      %540 = vmatpush1.msra.mxu0 0.0
      %541 = vmatprep.subr.mxu0 0.0
      %542 = vmatpush1.msra.mxu0 0.0
      %543 = vmatprep.subr.mxu0 0.0
      %544 = vmatpush1.msra.mxu0 0.0
      %545 = vmatprep.subr.mxu0 0.0
      %546 = vmatpush1.msra.mxu0 0.0
      %547 = vmatprep.subr.mxu0 0.0
      %548 = vmatpush1.msra.mxu0 0.0
      %549 = vmatprep.subr.mxu0 0.0
      %550 = vmatpush1.msra.mxu0 0.0
      %551 = vmatprep.mubr.f32.mxu0 0.0
      %552 = vmatmul.mubr.f32.gmra.mrb[0].mxu0 %v485
      %v553 = vpop.f32.mrb[0].mxu0
      %v554 = vadd.f32 0.0, %v553
      %v555 = vpop.f32.mrb[0].mxu0
      %556 = vdwg.mxu0
      %557 = vrot.lane.b32.xlu0 %v379, 112
      %v558 = vpop.permute.xlu0 %557
      %559 = vrot.lane.b32.xlu0 %v379, 80
      %v560 = vpop.permute.xlu0 %559
      %v561 = vsel %vm394, %v558, 0
      %v563 = vsel %vm394, %v560, 0
      %565 = vmatprep.subr.mxu0 0.0
      %566 = vmatpush1.xpose.msra.mxu0 %v563
      %567 = vmatprep.subr.mxu0 0.0
      %568 = vmatpush1.xpose.msra.mxu0 0.0
      %569 = vmatprep.subr.mxu0 0.0
      %570 = vmatpush1.xpose.msra.mxu0 0.0
      %571 = vmatprep.subr.mxu0 0.0
      %572 = vmatpush1.xpose.msra.mxu0 0.0
      %573 = vmatprep.subr.mxu0 0.0
      %574 = vmatpush1.xpose.msra.mxu0 0.0
      %575 = vmatprep.subr.mxu0 0.0
      %576 = vmatpush1.xpose.msra.mxu0 0.0
      %577 = vmatprep.subr.mxu0 0.0
      %578 = vmatpush1.xpose.msra.mxu0 0.0
      %579 = vmatprep.subr.mxu0 0.0
      %580 = vmatpush1.xpose.msra.mxu0 0.0
      %581 = vmatprep.subr.mxu0 0.0
      %582 = vmatpush1.xpose.msra.mxu0 0.0
      %583 = vmatprep.subr.mxu0 0.0
      %584 = vmatpush1.xpose.msra.mxu0 0.0
      %585 = vmatprep.subr.mxu0 0.0
      %586 = vmatpush1.xpose.msra.mxu0 0.0
      %587 = vmatprep.subr.mxu0 0.0
      %588 = vmatpush1.xpose.msra.mxu0 0.0
      %589 = vmatprep.subr.mxu0 0.0
      %590 = vmatpush1.xpose.msra.mxu0 0.0
      %591 = vmatprep.subr.mxu0 0.0
      %592 = vmatpush1.xpose.msra.mxu0 0.0
      %593 = vmatprep.subr.mxu0 0.0
      %594 = vmatpush1.xpose.msra.mxu0 0.0
      %595 = vmatprep.subr.mxu0 0.0
      %596 = vmatpush1.xpose.msra.mxu0 0.0
      %597 = vmatprep.subr.mxu0 0.0
      %598 = vmatpush1.xpose.msra.mxu0 0.0
      %599 = vmatprep.subr.mxu0 0.0
      %600 = vmatpush1.xpose.msra.mxu0 0.0
      %601 = vmatprep.subr.mxu0 0.0
      %602 = vmatpush1.xpose.msra.mxu0 0.0
      %603 = vmatprep.subr.mxu0 0.0
      %604 = vmatpush1.xpose.msra.mxu0 0.0
      %605 = vmatprep.subr.mxu0 0.0
      %606 = vmatpush1.xpose.msra.mxu0 0.0
      %607 = vmatprep.subr.mxu0 0.0
      %608 = vmatpush1.xpose.msra.mxu0 0.0
      %609 = vmatprep.subr.mxu0 0.0
      %610 = vmatpush1.xpose.msra.mxu0 0.0
      %611 = vmatprep.subr.mxu0 0.0
      %612 = vmatpush1.xpose.msra.mxu0 0.0
      %613 = vmatprep.subr.mxu0 0.0
      %614 = vmatpush1.xpose.msra.mxu0 0.0
      %615 = vmatprep.subr.mxu0 0.0
      %616 = vmatpush1.xpose.msra.mxu0 0.0
      %617 = vmatprep.subr.mxu0 0.0
      %618 = vmatpush1.xpose.msra.mxu0 0.0
      %619 = vmatprep.subr.mxu0 0.0
      %620 = vmatpush1.xpose.msra.mxu0 0.0
      %621 = vmatprep.subr.mxu0 0.0
      %622 = vmatpush1.xpose.msra.mxu0 0.0
      %623 = vmatprep.subr.mxu0 0.0
      %624 = vmatpush1.xpose.msra.mxu0 0.0
      %625 = vmatprep.subr.mxu0 0.0
      %626 = vmatpush1.xpose.msra.mxu0 0.0
      %627 = vmatprep.subr.mxu0 0.0
      %628 = vmatpush1.xpose.msra.mxu0 0.0
      %629 = vmatprep.mubr.f32.mxu0 0.0
      %630 = vmatmul.mubr.f32.gmra.mrb[0].mxu0 %v561
      %v631 = vpop.f32.mrb[0].mxu0
      %v632 = vadd.f32 %v389, %v631
      %v633 = vpop.f32.mrb[0].mxu0
      %634 = vdwg.mxu0
      %v635 = vsel %vm469, %v632, -inf
      %636 = vmax.xlane.f32.xlu0 %v635
      %v637 = vpop.xlane.xlu0 %636
      %v638 = vsub.f32 %v632, %v637
      %v639 = vmul.f32 %v638, 1.442695
      %v640 = vpow.pop %v639
      %v641 = vsel %vm469, %v640, 0.0
      %642 = vadd.xlane.f32.xlu0 %v641
      %v643 = vpop.xlane.xlu0 %642
      %v644 = vrcp.pop %v643
      %v645 = vmul.f32 %v640, %v644
      %646 = vrot.lane.b32.xlu0 %v379, 48
      %v647 = vpop.permute.xlu0 %646
      %v650 = vsel %vm469, %v645, 0
      %652 = vmatprep.subr.mxu0 0.0
      %653 = vmatpush1.msra.mxu0 %v647
      %654 = vmatprep.subr.mxu0 0.0
      %655 = vmatpush1.msra.mxu0 0.0
      %656 = vmatprep.subr.mxu0 0.0
      %657 = vmatpush1.msra.mxu0 0.0
      %658 = vmatprep.subr.mxu0 0.0
      %659 = vmatpush1.msra.mxu0 0.0
      %660 = vmatprep.subr.mxu0 0.0
      %661 = vmatpush1.msra.mxu0 0.0
      %662 = vmatprep.subr.mxu0 0.0
      %663 = vmatpush1.msra.mxu0 0.0
      %664 = vmatprep.subr.mxu0 0.0
      %665 = vmatpush1.msra.mxu0 0.0
      %666 = vmatprep.subr.mxu0 0.0
      %667 = vmatpush1.msra.mxu0 0.0
      %668 = vmatprep.subr.mxu0 0.0
      %669 = vmatpush1.msra.mxu0 0.0
      %670 = vmatprep.subr.mxu0 0.0
      %671 = vmatpush1.msra.mxu0 0.0
      %672 = vmatprep.subr.mxu0 0.0
      %673 = vmatpush1.msra.mxu0 0.0
      %674 = vmatprep.subr.mxu0 0.0
      %675 = vmatpush1.msra.mxu0 0.0
      %676 = vmatprep.subr.mxu0 0.0
      %677 = vmatpush1.msra.mxu0 0.0
      %678 = vmatprep.subr.mxu0 0.0
      %679 = vmatpush1.msra.mxu0 0.0
      %680 = vmatprep.subr.mxu0 0.0
      %681 = vmatpush1.msra.mxu0 0.0
      %682 = vmatprep.subr.mxu0 0.0
      %683 = vmatpush1.msra.mxu0 0.0
      %684 = vmatprep.subr.mxu0 0.0
      %685 = vmatpush1.msra.mxu0 0.0
      %686 = vmatprep.subr.mxu0 0.0
      %687 = vmatpush1.msra.mxu0 0.0
      %688 = vmatprep.subr.mxu0 0.0
      %689 = vmatpush1.msra.mxu0 0.0
      %690 = vmatprep.subr.mxu0 0.0
      %691 = vmatpush1.msra.mxu0 0.0
      %692 = vmatprep.subr.mxu0 0.0
      %693 = vmatpush1.msra.mxu0 0.0
      %694 = vmatprep.subr.mxu0 0.0
      %695 = vmatpush1.msra.mxu0 0.0
      %696 = vmatprep.subr.mxu0 0.0
      %697 = vmatpush1.msra.mxu0 0.0
      %698 = vmatprep.subr.mxu0 0.0
      %699 = vmatpush1.msra.mxu0 0.0
      %700 = vmatprep.subr.mxu0 0.0
      %701 = vmatpush1.msra.mxu0 0.0
      %702 = vmatprep.subr.mxu0 0.0
      %703 = vmatpush1.msra.mxu0 0.0
      %704 = vmatprep.subr.mxu0 0.0
      %705 = vmatpush1.msra.mxu0 0.0
      %706 = vmatprep.subr.mxu0 0.0
      %707 = vmatpush1.msra.mxu0 0.0
      %708 = vmatprep.subr.mxu0 0.0
      %709 = vmatpush1.msra.mxu0 0.0
      %710 = vmatprep.subr.mxu0 0.0
      %711 = vmatpush1.msra.mxu0 0.0
      %712 = vmatprep.subr.mxu0 0.0
      %713 = vmatpush1.msra.mxu0 0.0
      %714 = vmatprep.subr.mxu0 0.0
      %715 = vmatpush1.msra.mxu0 0.0
      %716 = vmatprep.mubr.f32.mxu0 0.0
      %717 = vmatmul.mubr.f32.gmra.mrb[0].mxu0 %v650
      %v718 = vpop.f32.mrb[0].mxu0
      %v719 = vadd.f32 0.0, %v718
      %v720 = vpop.f32.mrb[0].mxu0
      %721 = vdwg.mxu0
      %723 = vrot.lane.b32.xlu0 %v719, 16
      %v724 = vpop.permute.xlu0 %723
      %v726 = vsel %vm394, %v554, %v724
      %v727 = vpack.c.bf16 %v726, %v726
      %v728 = vld [vmem:[%s3] sm:$0xf]
      %v729 = vld [vmem:[%s3 + $0x4] sm:$0xf]
      %v730 = vld [vmem:[%s3 + $0x8] sm:$0xf]
      %v731 = vld [vmem:[%s3 + $0xc] sm:$0xf]
      %v732 = vld [vmem:[%s4] sm:$0x1]
      %v734 = vlaneseq
      %v735 = vshrl.u32 %v734, 7
      %v736 = vsub.s32 0, %v735
      %v737 = vrot.slane %v732, %v736
      %v743 = vunpack.c.l.b16 %v728
      %v744 = vunpack.c.l.b16 %v729
      %v745 = vunpack.c.l.b16 %v730
      %v746 = vunpack.c.l.b16 %v731
      %v747 = vpack.c.b16 %v744, %v743
      %v748 = vpack.c.b16 %v746, %v745
      %v752 = vsel %vm340, %v727, 0
      %754 = vmatprep.subr.bf16.mxu0 0
      %755 = vmatpush1.bf16.msra.mxu0 %v747
      %756 = vmatprep.subr.bf16.mxu0 0
      %757 = vmatpush1.bf16.msra.mxu0 %v748
      %758 = vmatprep.subr.bf16.mxu0 0
      %759 = vmatpush1.bf16.msra.mxu0 0
      %760 = vmatprep.subr.bf16.mxu0 0
      %761 = vmatpush1.bf16.msra.mxu0 0
      %762 = vmatprep.subr.bf16.mxu0 0
      %763 = vmatpush1.bf16.msra.mxu0 0
      %764 = vmatprep.subr.bf16.mxu0 0
      %765 = vmatpush1.bf16.msra.mxu0 0
      %766 = vmatprep.subr.bf16.mxu0 0
      %767 = vmatpush1.bf16.msra.mxu0 0
      %768 = vmatprep.subr.bf16.mxu0 0
      %769 = vmatpush1.bf16.msra.mxu0 0
      %770 = vmatprep.subr.bf16.mxu0 0
      %771 = vmatpush1.bf16.msra.mxu0 0
      %772 = vmatprep.subr.bf16.mxu0 0
      %773 = vmatpush1.bf16.msra.mxu0 0
      %774 = vmatprep.subr.bf16.mxu0 0
      %775 = vmatpush1.bf16.msra.mxu0 0
      %776 = vmatprep.subr.bf16.mxu0 0
      %777 = vmatpush1.bf16.msra.mxu0 0
      %778 = vmatprep.subr.bf16.mxu0 0
      %779 = vmatpush1.bf16.msra.mxu0 0
      %780 = vmatprep.subr.bf16.mxu0 0
      %781 = vmatpush1.bf16.msra.mxu0 0
      %782 = vmatprep.subr.bf16.mxu0 0
      %783 = vmatpush1.bf16.msra.mxu0 0
      %784 = vmatprep.subr.bf16.mxu0 0
      %785 = vmatpush1.bf16.msra.mxu0 0
      %786 = vmatprep.mubr.bf16.mxu0 0
      %787 = vmatmul.mubr.bf16.gmra.mrb[0].mxu0 %v752
      %v788 = vpop.f32.mrb[0].mxu0
      %v789 = vadd.f32 %v737, %v788
      %v790 = vpop.f32.mrb[0].mxu0
      %v791 = vpop.f32.mrb[0].mxu0
      %v792 = vpop.f32.mrb[0].mxu0
      %793 = vdwg.mxu0
      %v794 = vunpack.c.l.bf16 %v316
      %v795 = vadd.f32 %v789, %v794
      %v796 = vsel %vm340, %v795, 0.0
      %797 = vadd.xlane.f32.xlu0 %v796
      %v798 = vpop.xlane.xlu0 %797
      %v799 = vrcp.pop 32.0
      %v800 = vmul.f32 %v798, %v799
      %v801 = vsub.f32 %v795, %v800
      %v802 = vmul.f32 %v801, %v801
      %v803 = vsel %vm340, %v802, 0.0
      %804 = vadd.xlane.f32.xlu0 %v803
      %v805 = vpop.xlane.xlu0 %804
      %v806 = vmul.f32 %v805, %v799
      %v807 = vadd.f32 %v806, 1e-12
      %v808 = vrsqrt.pop %v807
      %v809 = vmul.f32 %v801, %v808
      %v810 = vld [vmem:[%s5] sm:$0x1]
      %v812 = vlaneseq
      %v813 = vshrl.u32 %v812, 7
      %v814 = vsub.s32 0, %v813
      %v815 = vrot.slane %v810, %v814
      %v817 = vmul.f32 %v809, %v815
      %v818 = vld [vmem:[%s6] sm:$0x1]
      %v820 = vlaneseq
      %v821 = vshrl.u32 %v820, 7
      %v822 = vsub.s32 0, %v821
      %v823 = vrot.slane %v818, %v822
      %v825 = vadd.f32 %v817, %v823
      %v826 = vpack.c.bf16 %v825, %v825
      %vm827 = vcmask 257024
      %828 = vst.msk [vmem:[%s314] sm:$0xf] %vm827, %v826
      %p829 = scmp.lt.s32.totalorder %s19, 1
      %s830 = scalar_select %p829, %s19, 1
      %s831 = smul.addr %s830, 4
      %s832 = scalar_lea.vmem %s8, %s831
      // Predicated region
      $region53: #{bert_embedder_forward.6} parent=51 // pred_check
        %p833 = pneg %p215
      $region54: #{bert_embedder_forward.6} parent=51 // pred_check_branch
        %835 = sbr.rel (%p833) target = $region56
      $region55: #{bert_embedder_forward.6} parent=51 // pred_region
        _
      $region56: #{bert_embedder_forward.6} parent=51 // pred_fallthru
        _
    $region52: #{bert_embedder_forward.6} parent=5 // pred_fallthru
      _
    %p836 = scmp.le.s32.totalorder 2, %s14
    // Predicated region
    $region57: #{bert_embedder_forward.6} parent=5 // pred_check
      %p837 = pneg %p836
    $region58: #{bert_embedder_forward.6} parent=5 // pred_check_branch
      %839 = sbr.rel (%p837) target = $region60
    $region59: #{bert_embedder_forward.6} parent=5 // pred_region
      %s840 = ssub.s32 %s14, 2
      // Predicated region
      $region61: #{bert_embedder_forward.6} parent=59 // pred_check
        %p841 = pneg %p221
      $region62: #{bert_embedder_forward.6} parent=59 // pred_check_branch
        %843 = sbr.rel (%p841) target = $region64
      $region63: #{bert_embedder_forward.6} parent=59 // pred_region
        %p844 = scmp.lt.s32.totalorder %s20, 1
        %s845 = scalar_select %p844, %s20, 1
        %s846 = smul.addr %s845, 4
        %s847 = scalar_lea.vmem %s8, %s846
      $region64: #{bert_embedder_forward.6} parent=59 // pred_fallthru
        _
    $region60: #{bert_embedder_forward.6} parent=5 // pred_fallthru
      _
  $region6: #{bert_embedder_forward.6} parent=0 // loop_footer
    %s18 = sadd.s32 1, %s14
  $region7: #{bert_embedder_forward.6} parent=0 // loop_footer_branch
    %13 = sbr.rel target = $region3
  $region8: #{bert_embedder_forward.6} parent=0 // loop_exit
    _

</llo_original>
